<compile_context>
chip_gen: v7x
topology: tpu7x:2x2x1
jax: 0.10.0
libtpu: 0.0.40
codegen_flags: <defaults>
</compile_context>

<pallas_src>
import functools

import jax
import jax.numpy as jnp
import numpy as np
from jax.experimental import pallas as pl
from jax.experimental.pallas import tpu as pltpu

EPS = 1e-5   # PyTorch BatchNorm default eps
NC = 32      # conv1 output channels
KK = 9       # 3x3 kernel taps
LANE = 128


def _round_up(x, m):
    return (x + m - 1) // m * m


def _fold_bn(gamma, beta, mean, var):
    scale = gamma / jnp.sqrt(var + EPS)
    return scale, beta - mean * scale


# ---------------------------------------------------------------------------
# Fused kernel (per batch tile):
#   conv = relu( p @ W2 + bc )        # MXU, block-sparse conv in hidden layout
#   out  = relu( conv @ Wfc + bfc )   # MXU, bn2 folded, lane-padded output
#
#   p_ref   : (TB, 9*OHW)  bf16   im2col patches (k-major columns)
#   w2_ref  : (9*OHW, H)   bf16   folded conv weights, H = 32*OHW (c*OHW + o)
#   bc_ref  : (1, H)       f32    folded conv bias
#   wfc_ref : (H, Dpad)    bf16   folded fc weights (zero-padded lanes)
#   bfc_ref : (1, Dpad)    f32    folded fc bias
#   out_ref : (TB, Dpad)   f32
# ---------------------------------------------------------------------------
def _fused_kernel(p_ref, w2_ref, bc_ref, wfc_ref, bfc_ref, out_ref):
    conv = jnp.dot(p_ref[...], w2_ref[...],
                   preferred_element_type=jnp.float32)     # (TB, H)
    conv = jnp.maximum(conv + bc_ref[...], 0.0)            # bias + relu (f32 VPU)
    y = jnp.dot(conv.astype(jnp.bfloat16), wfc_ref[...],
                preferred_element_type=jnp.float32)        # (TB, Dpad)
    out_ref[...] = jnp.maximum(y + bfc_ref[...], 0.0)


# ---------------------------------------------------------------------------
# One-time parameter preparation (BN folding, conv->matmul weight expansion,
# fc permutation/padding, bf16 casts).  NOT on the per-call path.
# ---------------------------------------------------------------------------
def fold_params(params, embedding_dim, img_h):
    D = embedding_dim
    img_w = D // img_h
    OH, OW = 2 * img_h - 2, img_w - 2
    OHW = OH * OW
    hidden = NC * OHW
    Dpad = _round_up(D, LANE)

    s0, b0 = _fold_bn(*params["bn0"])                      # scalars, shape (1,)
    s1, b1 = _fold_bn(*params["bn1"])                      # (32,)
    s2, b2 = _fold_bn(*params["bn2"])                      # (D,)

    wc = params["conv_w"].reshape(NC, KK)                  # (32, 9), k = ki*3+kj
    wsum = wc.sum(axis=1)                                  # (32,)
    wc_eff = wc * (s1[:, None] * s0[0])                    # bn0 + bn1 folded
    bc_eff = s1 * (b0[0] * wsum + params["conv_b"]) + b1   # (32,)

    # Block-sparse conv-as-matmul weights:
    #   W2[k*OHW + o, c*OHW + o'] = wc_eff[c, k] * (o == o')
    eye = jnp.eye(OHW, dtype=jnp.float32)
    w2 = (wc_eff.T[:, None, :, None] * eye[None, :, None, :]
          ).reshape(KK * OHW, hidden)                      # (324, 1152)
    bc_big = jnp.repeat(bc_eff, OHW).reshape(1, hidden)    # (1, 1152)

    wfc = params["fc_w"].T * s2[None, :]                   # (hidden, D), bn2 folded
    wfc_pad = jnp.zeros((hidden, Dpad), jnp.float32).at[:, :D].set(wfc)
    bfc = s2 * params["fc_b"] + b2                         # (D,)
    bfc_pad = jnp.zeros((1, Dpad), jnp.float32).at[0, :D].set(bfc)

    return {
        "w2": w2.astype(jnp.bfloat16),
        "bc": bc_big,
        "wfc": wfc_pad.astype(jnp.bfloat16),
        "bfc": bfc_pad,
    }


# ---------------------------------------------------------------------------
# Per-call forward: im2col glue + one pallas_call.
# ---------------------------------------------------------------------------
@functools.partial(jax.jit, static_argnames=("img_h",))
def core_conve_forward(h, r, folded, *, img_h):
    B, D = h.shape
    img_w = D // img_h
    OH, OW = 2 * img_h - 2, img_w - 2
    OHW = OH * OW
    KP = KK * OHW
    hidden = NC * OHW
    Dpad = folded["wfc"].shape[1]

    # torch.cat([h, r], 2) + im2col, k-major columns (col = k*OHW + o).
    x = jnp.concatenate(
        [h.reshape(B, img_h, img_w), r.reshape(B, img_h, img_w)], axis=1)
    pat = jnp.stack([x[:, ki:ki + OH, kj:kj + OW]
                     for ki in range(3) for kj in range(3)], axis=1)
    p = pat.reshape(B, KP).astype(jnp.bfloat16)            # (B, 324)

    # Batch tiling: tile is a multiple of 8 sublanes, capped at 256 rows.
    BP0 = _round_up(B, 8)
    TB = min(256, BP0)
    BP = _round_up(B, TB)
    if BP != B:
        p = jnp.pad(p, ((0, BP - B), (0, 0)))

    out = pl.pallas_call(
        _fused_kernel,
        out_shape=jax.ShapeDtypeStruct((BP, Dpad), jnp.float32),
        grid=(BP // TB,),
        in_specs=[
            pl.BlockSpec((TB, KP), lambda i: (i, 0)),
            # Constant block indices -> weights stay VMEM-resident across steps.
            pl.BlockSpec((KP, hidden), lambda i: (0, 0)),
            pl.BlockSpec((1, hidden), lambda i: (0, 0)),
            pl.BlockSpec((hidden, Dpad), lambda i: (0, 0)),
            pl.BlockSpec((1, Dpad), lambda i: (0, 0)),
        ],
        out_specs=pl.BlockSpec((TB, Dpad), lambda i: (i, 0)),
        compiler_params=pltpu.CompilerParams(
            dimension_semantics=("parallel",)),
    )(p, folded["w2"], folded["bc"], folded["wfc"], folded["bfc"])
    return out[:B, :D]


# ---------------------------------------------------------------------------
# Pure-JAX reference (mirrors the PyTorch forward, eval-mode)
# ---------------------------------------------------------------------------
def reference_forward(h, r, params, img_h):
    B, D = h.shape
    img_w = D // img_h
    x = jnp.concatenate([h.reshape(B, 1, img_h, img_w),
                         r.reshape(B, 1, img_h, img_w)], axis=2)
    g0, be0, m0, v0 = params["bn0"]
    x = (x - m0) / jnp.sqrt(v0 + EPS) * g0 + be0
    y = jax.lax.conv_general_dilated(
        x, params["conv_w"], window_strides=(1, 1), padding="VALID",
        dimension_numbers=("NCHW", "OIHW", "NCHW"),
        precision=jax.lax.Precision.HIGHEST)
    y = y + params["conv_b"].reshape(1, NC, 1, 1)
    g1, be1, m1, v1 = params["bn1"]
    y = ((y - m1.reshape(1, NC, 1, 1)) / jnp.sqrt(v1.reshape(1, NC, 1, 1) + EPS)
         * g1.reshape(1, NC, 1, 1) + be1.reshape(1, NC, 1, 1))
    y = jnp.maximum(y, 0.0)
    y = y.reshape(B, -1)
    y = y @ params["fc_w"].T + params["fc_b"]
    g2, be2, m2, v2 = params["bn2"]
    y = (y - m2) / jnp.sqrt(v2 + EPS) * g2 + be2
    return jnp.maximum(y, 0.0)


if __name__ == "__main__":
    key = jax.random.PRNGKey(0)
    B, D, img_h = 4, 40, 10                       # embedding_dim=40 -> img_w=4
    img_w = D // img_h
    hidden = (2 * img_h - 2) * (img_w - 2) * NC   # 1152

    ks = jax.random.split(key, 16)
    h = jax.random.normal(ks[0], (B, D), jnp.float32)
    r = jax.random.normal(ks[1], (B, D), jnp.float32)

    params = {
        "conv_w": 0.1 * jax.random.normal(ks[2], (NC, 1, 3, 3), jnp.float32),
        "conv_b": 0.1 * jax.random.normal(ks[3], (NC,), jnp.float32),
        "fc_w": 0.02 * jax.random.normal(ks[4], (D, hidden), jnp.float32),
        "fc_b": 0.02 * jax.random.normal(ks[5], (D,), jnp.float32),
        # (gamma, beta, running_mean, running_var)
        "bn0": (1.0 + 0.1 * jax.random.normal(ks[6], (1,), jnp.float32),
                0.05 * jax.random.normal(ks[7], (1,), jnp.float32),
                0.01 * jax.random.normal(ks[8], (1,), jnp.float32),
                1.0 + 0.1 * jax.random.uniform(ks[9], (1,), jnp.float32)),
        "bn1": (1.0 + 0.1 * jax.random.normal(ks[10], (NC,), jnp.float32),
                0.05 * jax.random.normal(ks[11], (NC,), jnp.float32),
                0.01 * jax.random.normal(ks[12], (NC,), jnp.float32),
                1.0 + 0.1 * jax.random.uniform(ks[13], (NC,), jnp.float32)),
        "bn2": (1.0 + 0.1 * jax.random.normal(ks[14], (D,), jnp.float32),
                0.05 * jax.random.normal(ks[15], (D,), jnp.float32),
                jnp.zeros((D,), jnp.float32),
                jnp.ones((D,), jnp.float32)),
    }

    # One-time parameter preparation (off the per-call path).
    folded = fold_params(params, D, img_h)

    out = jax.block_until_ready(core_conve_forward(h, r, folded, img_h=img_h))
    ref = reference_forward(h, r, params, img_h)

    assert out.shape == (B, D)
    np.testing.assert_allclose(np.asarray(out), np.asarray(ref),
                               rtol=2e-2, atol=2e-2)
    print("KERNEL_OK")
</pallas_src>

<mosaic_0001>
module attributes {stable_mosaic.version = 11 : i64} {
  func.func @_fused_kernel(%arg0: i32, %arg1: memref<8x324xbf16, #tpu.memory_space<vmem>>, %arg2: memref<324x1152xbf16, #tpu.memory_space<vmem>>, %arg3: memref<1x1152xf32, #tpu.memory_space<vmem>>, %arg4: memref<1152x128xbf16, #tpu.memory_space<vmem>>, %arg5: memref<1x128xf32, #tpu.memory_space<vmem>>, %arg6: memref<8x128xf32, #tpu.memory_space<vmem>>) attributes {dimension_semantics = [#tpu.dimension_semantics<parallel>], iteration_bounds = array<i64: 1>, scalar_prefetch = 0 : i64, scratch_operands = 0 : i64, tpu.core_type = #tpu.core_type<tc>, window_params = [{transform_indices = @transform_0, window_bounds = array<i64: 8, 324>}, {pipeline_mode = #tpu.pipeline_mode<synchronous>, transform_indices = @transform_1, window_bounds = array<i64: 324, 1152>}, {pipeline_mode = #tpu.pipeline_mode<synchronous>, transform_indices = @transform_2, window_bounds = array<i64: 1, 1152>}, {pipeline_mode = #tpu.pipeline_mode<synchronous>, transform_indices = @transform_3, window_bounds = array<i64: 1152, 128>}, {pipeline_mode = #tpu.pipeline_mode<synchronous>, transform_indices = @transform_4, window_bounds = array<i64: 1, 128>}, {transform_indices = @transform_5, window_bounds = array<i64: 8, 128>}]} {
    %c0 = arith.constant 0 : index
    %c0_0 = arith.constant 0 : index
    %0 = vector.load %arg1[%c0, %c0_0] : memref<8x324xbf16, #tpu.memory_space<vmem>>, vector<8x324xbf16>
    %c0_1 = arith.constant 0 : index
    %c0_2 = arith.constant 0 : index
    %1 = vector.load %arg2[%c0_1, %c0_2] : memref<324x1152xbf16, #tpu.memory_space<vmem>>, vector<324x1152xbf16>
    %cst = arith.constant dense<0.000000e+00> : vector<8x1152xf32>
    %2 = tpu.matmul %0, %1, %cst {dimension_numbers = #tpu.dot_dimension_numbers<[1], [0], [0], [1], [0, 0, 1, 1], [], []>} : vector<8x324xbf16>, vector<324x1152xbf16>, vector<8x1152xf32> -> vector<8x1152xf32>
    %c0_3 = arith.constant 0 : index
    %c0_4 = arith.constant 0 : index
    %3 = vector.load %arg3[%c0_3, %c0_4] : memref<1x1152xf32, #tpu.memory_space<vmem>>, vector<1x1152xf32>
    %4 = vector.broadcast %3 : vector<1x1152xf32> to vector<8x1152xf32>
    %5 = arith.addf %2, %4 : vector<8x1152xf32>
    %cst_5 = arith.constant 0.000000e+00 : f32
    %6 = vector.broadcast %cst_5 : f32 to vector<8x1152xf32>
    %7 = arith.maximumf %5, %6 : vector<8x1152xf32>
    %8 = arith.truncf %7 : vector<8x1152xf32> to vector<8x1152xbf16>
    %c0_6 = arith.constant 0 : index
    %c0_7 = arith.constant 0 : index
    %9 = vector.load %arg4[%c0_6, %c0_7] : memref<1152x128xbf16, #tpu.memory_space<vmem>>, vector<1152x128xbf16>
    %cst_8 = arith.constant dense<0.000000e+00> : vector<8x128xf32>
    %10 = tpu.matmul %8, %9, %cst_8 {dimension_numbers = #tpu.dot_dimension_numbers<[1], [0], [0], [1], [0, 0, 1, 1], [], []>} : vector<8x1152xbf16>, vector<1152x128xbf16>, vector<8x128xf32> -> vector<8x128xf32>
    %c0_9 = arith.constant 0 : index
    %c0_10 = arith.constant 0 : index
    %11 = vector.load %arg5[%c0_9, %c0_10] : memref<1x128xf32, #tpu.memory_space<vmem>>, vector<1x128xf32>
    %12 = vector.broadcast %11 : vector<1x128xf32> to vector<8x128xf32>
    %13 = arith.addf %10, %12 : vector<8x128xf32>
    %cst_11 = arith.constant 0.000000e+00 : f32
    %14 = vector.broadcast %cst_11 : f32 to vector<8x128xf32>
    %15 = arith.maximumf %13, %14 : vector<8x128xf32>
    %c0_12 = arith.constant 0 : index
    %c0_13 = arith.constant 0 : index
    %16 = vector.load %arg6[%c0_12, %c0_13] : memref<8x128xf32, #tpu.memory_space<vmem>>, vector<8x128xf32>
    tpu.vector_store %arg6[%c0_12, %c0_13], %15 {strides = array<i32>} : memref<8x128xf32, #tpu.memory_space<vmem>>, vector<8x128xf32>,
    return
  }
  func.func @transform_0(%arg0: i32) -> (i32, i32) {
    %c0_i32 = arith.constant 0 : i32
    %c0_i32_0 = arith.constant 0 : i32
    return %arg0, %c0_i32 : i32, i32
  }
  func.func @transform_1(%arg0: i32) -> (i32, i32) {
    %c0_i32 = arith.constant 0 : i32
    %c0_i32_0 = arith.constant 0 : i32
    %c0_i32_1 = arith.constant 0 : i32
    return %c0_i32, %c0_i32_0 : i32, i32
  }
  func.func @transform_2(%arg0: i32) -> (i32, i32) {
    %c0_i32 = arith.constant 0 : i32
    %c0_i32_0 = arith.constant 0 : i32
    %c0_i32_1 = arith.constant 0 : i32
    return %c0_i32, %c0_i32_0 : i32, i32
  }
  func.func @transform_3(%arg0: i32) -> (i32, i32) {
    %c0_i32 = arith.constant 0 : i32
    %c0_i32_0 = arith.constant 0 : i32
    %c0_i32_1 = arith.constant 0 : i32
    return %c0_i32, %c0_i32_0 : i32, i32
  }
  func.func @transform_4(%arg0: i32) -> (i32, i32) {
    %c0_i32 = arith.constant 0 : i32
    %c0_i32_0 = arith.constant 0 : i32
    %c0_i32_1 = arith.constant 0 : i32
    return %c0_i32, %c0_i32_0 : i32, i32
  }
  func.func @transform_5(%arg0: i32) -> (i32, i32) {
    %c0_i32 = arith.constant 0 : i32
    %c0_i32_0 = arith.constant 0 : i32
    return %arg0, %c0_i32 : i32, i32
  }
}

</mosaic_0001>

<llo_original>
// kernel: core_conve_forward.1
$region0: #{core_conve_forward.1}
  #allocation0 [shape = 'u32[]', space=smem, size = 0x4, offset = 0x4, fixed_abs, tag = 'smem constant byte address 0x4 - core index']
  #allocation1 [shape = 'u32[144,128]{1,0:T(1,128)}', space=vmem, size = 0x12000, scoped, tag = 'internal scratch']
  %s0 = inlined_call_operand.vmem [shape: bf16[8,324], index: 0, kind: input, shape index: {}]
  %s1 = inlined_call_operand.hbm [shape: bf16[324,1152], index: 1, kind: input, shape index: {}]
  %s2 = inlined_call_operand.vmem [shape: f32[1,1152], index: 2, kind: input, shape index: {}]
  %s3 = inlined_call_operand.vmem [shape: bf16[1152,128], index: 3, kind: input, shape index: {}]
  %s4 = inlined_call_operand.vmem [shape: f32[1,128], index: 4, kind: input, shape index: {}]
  %s5 = inlined_call_operand.vmem [shape: f32[8,128], index: 5, kind: output, shape index: {}]
  %s6 = sld [smem:[#allocation0]]
  $region34: #{core_conve_forward.1} parent=0
    _
  %s8 = ssub.s32 1, %s6
  %s9 = scalar_select 0, %s8, %s6
  $region1: #{core_conve_forward.1} parent=0
    #allocation2 [shape = 'u8[755712]{0}', space=vmem, size = 0xb8800, scoped, tag = 'input window, operand 1, single buffered']
    #allocation3 [shape = 's32[1]{0}', space=sflag, size = 0x4, scoped, tag = 'scoped memory for core_conve_forward.1']
    %10 = vsyncpa [#allocation3], 0
    // Predicated region
    $region2: #{core_conve_forward.1} parent=1 // pred_check
      _
    $region3: #{core_conve_forward.1} parent=1 // pred_check_branch
      %12 = sbr.rel (0) target = $region5
    $region4: #{core_conve_forward.1} parent=1 // pred_region
      _
    $region5: #{core_conve_forward.1} parent=1 // pred_fallthru
      _
    // Predicated region
    $region6: #{core_conve_forward.1} parent=1 // pred_check
      _
    $region7: #{core_conve_forward.1} parent=1 // pred_check_branch
      %14 = sbr.rel (0) target = $region9
    $region8: #{core_conve_forward.1} parent=1 // pred_region
      %s16 = ssub.s32 23616, 23616
      %17 = vsyncadd [#allocation3], %s16
      %s18 = sshll.u32 [#allocation2], 4
      %s19 = int_to_ptr.vmem [resolvable:$true] %s18
      %24 = dma.hbm_to_vmem [thread:$0]  %s1, 23616, %s19, [#allocation3], 576, 576, 36
    $region9: #{core_conve_forward.1} parent=1 // pred_fallthru
      _
    // Predicated region
    $region10: #{core_conve_forward.1} parent=1 // pred_check
      _
    $region11: #{core_conve_forward.1} parent=1 // pred_check_branch
      %26 = sbr.rel (0) target = $region13
    $region12: #{core_conve_forward.1} parent=1 // pred_region
      _
    $region13: #{core_conve_forward.1} parent=1 // pred_fallthru
      _
    // Predicated region
    $region14: #{core_conve_forward.1} parent=1 // pred_check
      _
    $region15: #{core_conve_forward.1} parent=1 // pred_check_branch
      %28 = sbr.rel (0) target = $region17
    $region16: #{core_conve_forward.1} parent=1 // pred_region
      _
    $region17: #{core_conve_forward.1} parent=1 // pred_fallthru
      _
    // Predicated region
    $region18: #{core_conve_forward.1} parent=1 // pred_check
      _
    $region19: #{core_conve_forward.1} parent=1 // pred_check_branch
      %30 = sbr.rel (0) target = $region21
    $region20: #{core_conve_forward.1} parent=1 // pred_region
      _
    $region21: #{core_conve_forward.1} parent=1 // pred_fallthru
      _
    // Predicated region
    $region22: #{core_conve_forward.1} parent=1 // pred_check
      _
    $region23: #{core_conve_forward.1} parent=1 // pred_check_branch
      %32 = sbr.rel (0) target = $region25
    $region24: #{core_conve_forward.1} parent=1 // pred_region
      %33 = dma.done [#allocation3], 23616
    $region25: #{core_conve_forward.1} parent=1 // pred_fallthru
      _
    %v35 = vld [vmem:[%s0] sm:$0xff]
    %v36 = vld [vmem:[%s0 + $0x8] sm:$0xf]
    %v37 = vld [vmem:[#allocation2] sm:$0xff]
    %v38 = vld [vmem:[#allocation2 + $0x8] sm:$0xff]
    %v39 = vld [vmem:[#allocation2 + $0x10] sm:$0xff]
    %v40 = vld [vmem:[#allocation2 + $0x18] sm:$0xff]
    %v41 = vld [vmem:[#allocation2 + $0x20] sm:$0xf]
    %v42 = vld [vmem:[#allocation2 + $0x24] sm:$0xff]
    %v43 = vld [vmem:[#allocation2 + $0x2c] sm:$0xff]
    %v44 = vld [vmem:[#allocation2 + $0x34] sm:$0xff]
    %v45 = vld [vmem:[#allocation2 + $0x3c] sm:$0xff]
    %v46 = vld [vmem:[#allocation2 + $0x44] sm:$0xf]
    %v47 = vld [vmem:[#allocation2 + $0x48] sm:$0xff]
    %v48 = vld [vmem:[#allocation2 + $0x50] sm:$0xff]
    %v49 = vld [vmem:[#allocation2 + $0x58] sm:$0xff]
    %v50 = vld [vmem:[#allocation2 + $0x60] sm:$0xff]
    %v51 = vld [vmem:[#allocation2 + $0x68] sm:$0xf]
    %v52 = vld [vmem:[#allocation2 + $0x6c] sm:$0xff]
    %v53 = vld [vmem:[#allocation2 + $0x74] sm:$0xff]
    %v54 = vld [vmem:[#allocation2 + $0x7c] sm:$0xff]
    %v55 = vld [vmem:[#allocation2 + $0x84] sm:$0xff]
    %v56 = vld [vmem:[#allocation2 + $0x8c] sm:$0xf]
    %v57 = vld [vmem:[#allocation2 + $0x90] sm:$0xff]
    %v58 = vld [vmem:[#allocation2 + $0x98] sm:$0xff]
    %v59 = vld [vmem:[#allocation2 + $0xa0] sm:$0xff]
    %v60 = vld [vmem:[#allocation2 + $0xa8] sm:$0xff]
    %v61 = vld [vmem:[#allocation2 + $0xb0] sm:$0xf]
    %v62 = vld [vmem:[#allocation2 + $0xb4] sm:$0xff]
    %v63 = vld [vmem:[#allocation2 + $0xbc] sm:$0xff]
    %v64 = vld [vmem:[#allocation2 + $0xc4] sm:$0xff]
    %v65 = vld [vmem:[#allocation2 + $0xcc] sm:$0xff]
    %v66 = vld [vmem:[#allocation2 + $0xd4] sm:$0xf]
    %v67 = vld [vmem:[#allocation2 + $0xd8] sm:$0xff]
    %v68 = vld [vmem:[#allocation2 + $0xe0] sm:$0xff]
    %v69 = vld [vmem:[#allocation2 + $0xe8] sm:$0xff]
    %v70 = vld [vmem:[#allocation2 + $0xf0] sm:$0xff]
    %v71 = vld [vmem:[#allocation2 + $0xf8] sm:$0xf]
    %v72 = vld [vmem:[#allocation2 + $0xfc] sm:$0xff]
    %v73 = vld [vmem:[#allocation2 + $0x104] sm:$0xff]
    %v74 = vld [vmem:[#allocation2 + $0x10c] sm:$0xff]
    %v75 = vld [vmem:[#allocation2 + $0x114] sm:$0xff]
    %v76 = vld [vmem:[#allocation2 + $0x11c] sm:$0xf]
    %v77 = vld [vmem:[#allocation2 + $0x120] sm:$0xff]
    %v78 = vld [vmem:[#allocation2 + $0x128] sm:$0xff]
    %v79 = vld [vmem:[#allocation2 + $0x130] sm:$0xff]
    %v80 = vld [vmem:[#allocation2 + $0x138] sm:$0xff]
    %v81 = vld [vmem:[#allocation2 + $0x140] sm:$0xf]
    %v82 = vld [vmem:[#allocation2 + $0x144] sm:$0xff]
    %v83 = vld [vmem:[#allocation2 + $0x14c] sm:$0xff]
    %v84 = vld [vmem:[#allocation2 + $0x154] sm:$0xff]
    %v85 = vld [vmem:[#allocation2 + $0x15c] sm:$0xff]
    %v86 = vld [vmem:[#allocation2 + $0x164] sm:$0xf]
    %v87 = vld [vmem:[#allocation2 + $0x168] sm:$0xff]
    %v88 = vld [vmem:[#allocation2 + $0x170] sm:$0xff]
    %v89 = vld [vmem:[#allocation2 + $0x178] sm:$0xff]
    %v90 = vld [vmem:[#allocation2 + $0x180] sm:$0xff]
    %v91 = vld [vmem:[#allocation2 + $0x188] sm:$0xf]
    %v92 = vld [vmem:[#allocation2 + $0x18c] sm:$0xff]
    %v93 = vld [vmem:[#allocation2 + $0x194] sm:$0xff]
    %v94 = vld [vmem:[#allocation2 + $0x19c] sm:$0xff]
    %v95 = vld [vmem:[#allocation2 + $0x1a4] sm:$0xff]
    %v96 = vld [vmem:[#allocation2 + $0x1ac] sm:$0xf]
    %v97 = vld [vmem:[#allocation2 + $0x1b0] sm:$0xff]
    %v98 = vld [vmem:[#allocation2 + $0x1b8] sm:$0xff]
    %v99 = vld [vmem:[#allocation2 + $0x1c0] sm:$0xff]
    %v100 = vld [vmem:[#allocation2 + $0x1c8] sm:$0xff]
    %v101 = vld [vmem:[#allocation2 + $0x1d0] sm:$0xf]
    %v102 = vld [vmem:[#allocation2 + $0x1d4] sm:$0xff]
    %v103 = vld [vmem:[#allocation2 + $0x1dc] sm:$0xff]
    %v104 = vld [vmem:[#allocation2 + $0x1e4] sm:$0xff]
    %v105 = vld [vmem:[#allocation2 + $0x1ec] sm:$0xff]
    %v106 = vld [vmem:[#allocation2 + $0x1f4] sm:$0xf]
    %v107 = vld [vmem:[#allocation2 + $0x1f8] sm:$0xff]
    %v108 = vld [vmem:[#allocation2 + $0x200] sm:$0xff]
    %v109 = vld [vmem:[#allocation2 + $0x208] sm:$0xff]
    %v110 = vld [vmem:[#allocation2 + $0x210] sm:$0xff]
    %v111 = vld [vmem:[#allocation2 + $0x218] sm:$0xf]
    %v112 = vld [vmem:[#allocation2 + $0x21c] sm:$0xff]
    %v113 = vld [vmem:[#allocation2 + $0x224] sm:$0xff]
    %v114 = vld [vmem:[#allocation2 + $0x22c] sm:$0xff]
    %v115 = vld [vmem:[#allocation2 + $0x234] sm:$0xff]
    %v116 = vld [vmem:[#allocation2 + $0x23c] sm:$0xf]
    %v117 = vld [vmem:[#allocation2 + $0x240] sm:$0xff]
    %v118 = vld [vmem:[#allocation2 + $0x248] sm:$0xff]
    %v119 = vld [vmem:[#allocation2 + $0x250] sm:$0xff]
    %v120 = vld [vmem:[#allocation2 + $0x258] sm:$0xff]
    %v121 = vld [vmem:[#allocation2 + $0x260] sm:$0xf]
    %v122 = vld [vmem:[#allocation2 + $0x264] sm:$0xff]
    %v123 = vld [vmem:[#allocation2 + $0x26c] sm:$0xff]
    %v124 = vld [vmem:[#allocation2 + $0x274] sm:$0xff]
    %v125 = vld [vmem:[#allocation2 + $0x27c] sm:$0xff]
    %v126 = vld [vmem:[#allocation2 + $0x284] sm:$0xf]
    %v127 = vld [vmem:[#allocation2 + $0x288] sm:$0xff]
    %v128 = vld [vmem:[#allocation2 + $0x290] sm:$0xff]
    %v129 = vld [vmem:[#allocation2 + $0x298] sm:$0xff]
    %v130 = vld [vmem:[#allocation2 + $0x2a0] sm:$0xff]
    %v131 = vld [vmem:[#allocation2 + $0x2a8] sm:$0xf]
    %v132 = vld [vmem:[#allocation2 + $0x2ac] sm:$0xff]
    %v133 = vld [vmem:[#allocation2 + $0x2b4] sm:$0xff]
    %v134 = vld [vmem:[#allocation2 + $0x2bc] sm:$0xff]
    %v135 = vld [vmem:[#allocation2 + $0x2c4] sm:$0xff]
    %v136 = vld [vmem:[#allocation2 + $0x2cc] sm:$0xf]
    %v137 = vld [vmem:[#allocation2 + $0x2d0] sm:$0xff]
    %v138 = vld [vmem:[#allocation2 + $0x2d8] sm:$0xff]
    %v139 = vld [vmem:[#allocation2 + $0x2e0] sm:$0xff]
    %v140 = vld [vmem:[#allocation2 + $0x2e8] sm:$0xff]
    %v141 = vld [vmem:[#allocation2 + $0x2f0] sm:$0xf]
    %v142 = vld [vmem:[#allocation2 + $0x2f4] sm:$0xff]
    %v143 = vld [vmem:[#allocation2 + $0x2fc] sm:$0xff]
    %v144 = vld [vmem:[#allocation2 + $0x304] sm:$0xff]
    %v145 = vld [vmem:[#allocation2 + $0x30c] sm:$0xff]
    %v146 = vld [vmem:[#allocation2 + $0x314] sm:$0xf]
    %v147 = vld [vmem:[#allocation2 + $0x318] sm:$0xff]
    %v148 = vld [vmem:[#allocation2 + $0x320] sm:$0xff]
    %v149 = vld [vmem:[#allocation2 + $0x328] sm:$0xff]
    %v150 = vld [vmem:[#allocation2 + $0x330] sm:$0xff]
    %v151 = vld [vmem:[#allocation2 + $0x338] sm:$0xf]
    %v152 = vld [vmem:[#allocation2 + $0x33c] sm:$0xff]
    %v153 = vld [vmem:[#allocation2 + $0x344] sm:$0xff]
    %v154 = vld [vmem:[#allocation2 + $0x34c] sm:$0xff]
    %v155 = vld [vmem:[#allocation2 + $0x354] sm:$0xff]
    %v156 = vld [vmem:[#allocation2 + $0x35c] sm:$0xf]
    %v157 = vld [vmem:[#allocation2 + $0x360] sm:$0xff]
    %v158 = vld [vmem:[#allocation2 + $0x368] sm:$0xff]
    %v159 = vld [vmem:[#allocation2 + $0x370] sm:$0xff]
    %v160 = vld [vmem:[#allocation2 + $0x378] sm:$0xff]
    %v161 = vld [vmem:[#allocation2 + $0x380] sm:$0xf]
    %v162 = vld [vmem:[#allocation2 + $0x384] sm:$0xff]
    %v163 = vld [vmem:[#allocation2 + $0x38c] sm:$0xff]
    %v164 = vld [vmem:[#allocation2 + $0x394] sm:$0xff]
    %v165 = vld [vmem:[#allocation2 + $0x39c] sm:$0xff]
    %v166 = vld [vmem:[#allocation2 + $0x3a4] sm:$0xf]
    %v167 = vld [vmem:[#allocation2 + $0x3a8] sm:$0xff]
    %v168 = vld [vmem:[#allocation2 + $0x3b0] sm:$0xff]
    %v169 = vld [vmem:[#allocation2 + $0x3b8] sm:$0xff]
    %v170 = vld [vmem:[#allocation2 + $0x3c0] sm:$0xff]
    %v171 = vld [vmem:[#allocation2 + $0x3c8] sm:$0xf]
    %v172 = vld [vmem:[#allocation2 + $0x3cc] sm:$0xff]
    %v173 = vld [vmem:[#allocation2 + $0x3d4] sm:$0xff]
    %v174 = vld [vmem:[#allocation2 + $0x3dc] sm:$0xff]
    %v175 = vld [vmem:[#allocation2 + $0x3e4] sm:$0xff]
    %v176 = vld [vmem:[#allocation2 + $0x3ec] sm:$0xf]
    %v177 = vld [vmem:[#allocation2 + $0x3f0] sm:$0xff]
    %v178 = vld [vmem:[#allocation2 + $0x3f8] sm:$0xff]
    %v179 = vld [vmem:[#allocation2 + $0x400] sm:$0xff]
    %v180 = vld [vmem:[#allocation2 + $0x408] sm:$0xff]
    %v181 = vld [vmem:[#allocation2 + $0x410] sm:$0xf]
    %v182 = vld [vmem:[#allocation2 + $0x414] sm:$0xff]
    %v183 = vld [vmem:[#allocation2 + $0x41c] sm:$0xff]
    %v184 = vld [vmem:[#allocation2 + $0x424] sm:$0xff]
    %v185 = vld [vmem:[#allocation2 + $0x42c] sm:$0xff]
    %v186 = vld [vmem:[#allocation2 + $0x434] sm:$0xf]
    %v187 = vld [vmem:[#allocation2 + $0x438] sm:$0xff]
    %v188 = vld [vmem:[#allocation2 + $0x440] sm:$0xff]
    %v189 = vld [vmem:[#allocation2 + $0x448] sm:$0xff]
    %v190 = vld [vmem:[#allocation2 + $0x450] sm:$0xff]
    %v191 = vld [vmem:[#allocation2 + $0x458] sm:$0xf]
    %v192 = vld [vmem:[#allocation2 + $0x45c] sm:$0xff]
    %v193 = vld [vmem:[#allocation2 + $0x464] sm:$0xff]
    %v194 = vld [vmem:[#allocation2 + $0x46c] sm:$0xff]
    %v195 = vld [vmem:[#allocation2 + $0x474] sm:$0xff]
    %v196 = vld [vmem:[#allocation2 + $0x47c] sm:$0xf]
    %v197 = vld [vmem:[#allocation2 + $0x480] sm:$0xff]
    %v198 = vld [vmem:[#allocation2 + $0x488] sm:$0xff]
    %v199 = vld [vmem:[#allocation2 + $0x490] sm:$0xff]
    %v200 = vld [vmem:[#allocation2 + $0x498] sm:$0xff]
    %v201 = vld [vmem:[#allocation2 + $0x4a0] sm:$0xf]
    %v202 = vld [vmem:[#allocation2 + $0x4a4] sm:$0xff]
    %v203 = vld [vmem:[#allocation2 + $0x4ac] sm:$0xff]
    %v204 = vld [vmem:[#allocation2 + $0x4b4] sm:$0xff]
    %v205 = vld [vmem:[#allocation2 + $0x4bc] sm:$0xff]
    %v206 = vld [vmem:[#allocation2 + $0x4c4] sm:$0xf]
    %v207 = vld [vmem:[#allocation2 + $0x4c8] sm:$0xff]
    %v208 = vld [vmem:[#allocation2 + $0x4d0] sm:$0xff]
    %v209 = vld [vmem:[#allocation2 + $0x4d8] sm:$0xff]
    %v210 = vld [vmem:[#allocation2 + $0x4e0] sm:$0xff]
    %v211 = vld [vmem:[#allocation2 + $0x4e8] sm:$0xf]
    %v212 = vld [vmem:[#allocation2 + $0x4ec] sm:$0xff]
    %v213 = vld [vmem:[#allocation2 + $0x4f4] sm:$0xff]
    %v214 = vld [vmem:[#allocation2 + $0x4fc] sm:$0xff]
    %v215 = vld [vmem:[#allocation2 + $0x504] sm:$0xff]
    %v216 = vld [vmem:[#allocation2 + $0x50c] sm:$0xf]
    %v217 = vld [vmem:[#allocation2 + $0x510] sm:$0xff]
    %v218 = vld [vmem:[#allocation2 + $0x518] sm:$0xff]
    %v219 = vld [vmem:[#allocation2 + $0x520] sm:$0xff]
    %v220 = vld [vmem:[#allocation2 + $0x528] sm:$0xff]
    %v221 = vld [vmem:[#allocation2 + $0x530] sm:$0xf]
    %v222 = vld [vmem:[#allocation2 + $0x534] sm:$0xff]
    %v223 = vld [vmem:[#allocation2 + $0x53c] sm:$0xff]
    %v224 = vld [vmem:[#allocation2 + $0x544] sm:$0xff]
    %v225 = vld [vmem:[#allocation2 + $0x54c] sm:$0xff]
    %v226 = vld [vmem:[#allocation2 + $0x554] sm:$0xf]
    %v227 = vld [vmem:[#allocation2 + $0x558] sm:$0xff]
    %v228 = vld [vmem:[#allocation2 + $0x560] sm:$0xff]
    %v229 = vld [vmem:[#allocation2 + $0x568] sm:$0xff]
    %v230 = vld [vmem:[#allocation2 + $0x570] sm:$0xff]
    %v231 = vld [vmem:[#allocation2 + $0x578] sm:$0xf]
    %v232 = vld [vmem:[#allocation2 + $0x57c] sm:$0xff]
    %v233 = vld [vmem:[#allocation2 + $0x584] sm:$0xff]
    %v234 = vld [vmem:[#allocation2 + $0x58c] sm:$0xff]
    %v235 = vld [vmem:[#allocation2 + $0x594] sm:$0xff]
    %v236 = vld [vmem:[#allocation2 + $0x59c] sm:$0xf]
    %v237 = vld [vmem:[#allocation2 + $0x5a0] sm:$0x33]
    %v238 = vld [vmem:[#allocation2 + $0x5a8] sm:$0x33]
    %v239 = vld [vmem:[#allocation2 + $0x5b0] sm:$0x33]
    %v240 = vld [vmem:[#allocation2 + $0x5b8] sm:$0x33]
    %v241 = vld [vmem:[#allocation2 + $0x5c0] sm:$0x3]
    %v242 = vld [vmem:[%s2] sm:$0xff]
    %v243 = vld [vmem:[%s2 + $0x8] sm:$0x1]
    %v246 = vlaneseq
    %v247 = vshrl.u32 %v246, 7
    %v248 = vsub.s32 0, %v247
    %v249 = vrot.slane %v242, %v248
    %v250 = vlaneseq
    %v251 = vshrl.u32 %v250, 7
    %v252 = vsub.s32 1, %v251
    %v253 = vrot.slane %v242, %v252
    %v254 = vlaneseq
    %v255 = vshrl.u32 %v254, 7
    %v256 = vsub.s32 2, %v255
    %v257 = vrot.slane %v242, %v256
    %v258 = vlaneseq
    %v259 = vshrl.u32 %v258, 7
    %v260 = vsub.s32 3, %v259
    %v261 = vrot.slane %v242, %v260
    %v262 = vlaneseq
    %v263 = vshrl.u32 %v262, 7
    %v264 = vsub.s32 4, %v263
    %v265 = vrot.slane %v242, %v264
    %v266 = vlaneseq
    %v267 = vshrl.u32 %v266, 7
    %v268 = vsub.s32 5, %v267
    %v269 = vrot.slane %v242, %v268
    %v270 = vlaneseq
    %v271 = vshrl.u32 %v270, 7
    %v272 = vsub.s32 6, %v271
    %v273 = vrot.slane %v242, %v272
    %v274 = vlaneseq
    %v275 = vshrl.u32 %v274, 7
    %v276 = vsub.s32 7, %v275
    %v277 = vrot.slane %v242, %v276
    %v278 = vlaneseq
    %v279 = vshrl.u32 %v278, 7
    %v280 = vsub.s32 0, %v279
    %v281 = vrot.slane %v243, %v280
    %v293 = vunpack.c.l.b16 %v35
    %v294 = vunpack.c.h.b16 %v35
    %v295 = vunpack.c.l.b16 %v36
    %v296 = vpack.c.b16 %v293, %v293
    %v297 = vpack.c.b16 %v294, %v294
    %v298 = vpack.c.b16 %v295, %v295
    %v506 = vunpack.c.l.b16 %v37
    %v507 = vunpack.c.h.b16 %v37
    %v508 = vunpack.c.l.b16 %v38
    %v509 = vunpack.c.h.b16 %v38
    %v510 = vunpack.c.l.b16 %v39
    %v511 = vunpack.c.h.b16 %v39
    %v512 = vunpack.c.l.b16 %v40
    %v513 = vunpack.c.h.b16 %v40
    %v514 = vunpack.c.l.b16 %v41
    %v515 = vunpack.c.l.b16 %v42
    %v516 = vunpack.c.h.b16 %v42
    %v517 = vunpack.c.l.b16 %v43
    %v518 = vunpack.c.h.b16 %v43
    %v519 = vunpack.c.l.b16 %v44
    %v520 = vunpack.c.h.b16 %v44
    %v521 = vunpack.c.l.b16 %v45
    %v522 = vunpack.c.h.b16 %v45
    %v523 = vunpack.c.l.b16 %v46
    %v524 = vunpack.c.l.b16 %v47
    %v525 = vunpack.c.h.b16 %v47
    %v526 = vunpack.c.l.b16 %v48
    %v527 = vunpack.c.h.b16 %v48
    %v528 = vunpack.c.l.b16 %v49
    %v529 = vunpack.c.h.b16 %v49
    %v530 = vunpack.c.l.b16 %v50
    %v531 = vunpack.c.h.b16 %v50
    %v532 = vunpack.c.l.b16 %v51
    %v533 = vunpack.c.l.b16 %v52
    %v534 = vunpack.c.h.b16 %v52
    %v535 = vunpack.c.l.b16 %v53
    %v536 = vunpack.c.h.b16 %v53
    %v537 = vunpack.c.l.b16 %v54
    %v538 = vunpack.c.h.b16 %v54
    %v539 = vunpack.c.l.b16 %v55
    %v540 = vunpack.c.h.b16 %v55
    %v541 = vunpack.c.l.b16 %v56
    %v542 = vunpack.c.l.b16 %v57
    %v543 = vunpack.c.h.b16 %v57
    %v544 = vunpack.c.l.b16 %v58
    %v545 = vunpack.c.h.b16 %v58
    %v546 = vunpack.c.l.b16 %v59
    %v547 = vunpack.c.h.b16 %v59
    %v548 = vunpack.c.l.b16 %v60
    %v549 = vunpack.c.h.b16 %v60
    %v550 = vunpack.c.l.b16 %v61
    %v551 = vunpack.c.l.b16 %v62
    %v552 = vunpack.c.h.b16 %v62
    %v553 = vunpack.c.l.b16 %v63
    %v554 = vunpack.c.h.b16 %v63
    %v555 = vunpack.c.l.b16 %v64
    %v556 = vunpack.c.h.b16 %v64
    %v557 = vunpack.c.l.b16 %v65
    %v558 = vunpack.c.h.b16 %v65
    %v559 = vunpack.c.l.b16 %v66
    %v560 = vunpack.c.l.b16 %v67
    %v561 = vunpack.c.h.b16 %v67
    %v562 = vunpack.c.l.b16 %v68
    %v563 = vunpack.c.h.b16 %v68
    %v564 = vunpack.c.l.b16 %v69
    %v565 = vunpack.c.h.b16 %v69
    %v566 = vunpack.c.l.b16 %v70
    %v567 = vunpack.c.h.b16 %v70
    %v568 = vunpack.c.l.b16 %v71
    %v569 = vunpack.c.l.b16 %v72
    %v570 = vunpack.c.h.b16 %v72
    %v571 = vunpack.c.l.b16 %v73
    %v572 = vunpack.c.h.b16 %v73
    %v573 = vunpack.c.l.b16 %v74
    %v574 = vunpack.c.h.b16 %v74
    %v575 = vunpack.c.l.b16 %v75
    %v576 = vunpack.c.h.b16 %v75
    %v577 = vunpack.c.l.b16 %v76
    %v578 = vunpack.c.l.b16 %v77
    %v579 = vunpack.c.h.b16 %v77
    %v580 = vunpack.c.l.b16 %v78
    %v581 = vunpack.c.h.b16 %v78
    %v582 = vunpack.c.l.b16 %v79
    %v583 = vunpack.c.h.b16 %v79
    %v584 = vunpack.c.l.b16 %v80
    %v585 = vunpack.c.h.b16 %v80
    %v586 = vunpack.c.l.b16 %v81
    %v587 = vunpack.c.l.b16 %v82
    %v588 = vunpack.c.h.b16 %v82
    %v589 = vunpack.c.l.b16 %v83
    %v590 = vunpack.c.h.b16 %v83
    %v591 = vunpack.c.l.b16 %v84
    %v592 = vunpack.c.h.b16 %v84
    %v593 = vunpack.c.l.b16 %v85
    %v594 = vunpack.c.h.b16 %v85
    %v595 = vunpack.c.l.b16 %v86
    %v596 = vunpack.c.l.b16 %v87
    %v597 = vunpack.c.h.b16 %v87
    %v598 = vunpack.c.l.b16 %v88
    %v599 = vunpack.c.h.b16 %v88
    %v600 = vunpack.c.l.b16 %v89
    %v601 = vunpack.c.h.b16 %v89
    %v602 = vunpack.c.l.b16 %v90
    %v603 = vunpack.c.h.b16 %v90
    %v604 = vunpack.c.l.b16 %v91
    %v605 = vunpack.c.l.b16 %v92
    %v606 = vunpack.c.h.b16 %v92
    %v607 = vunpack.c.l.b16 %v93
    %v608 = vunpack.c.h.b16 %v93
    %v609 = vunpack.c.l.b16 %v94
    %v610 = vunpack.c.h.b16 %v94
    %v611 = vunpack.c.l.b16 %v95
    %v612 = vunpack.c.h.b16 %v95
    %v613 = vunpack.c.l.b16 %v96
    %v614 = vunpack.c.l.b16 %v97
    %v615 = vunpack.c.h.b16 %v97
    %v616 = vunpack.c.l.b16 %v98
    %v617 = vunpack.c.h.b16 %v98
    %v618 = vunpack.c.l.b16 %v99
    %v619 = vunpack.c.h.b16 %v99
    %v620 = vunpack.c.l.b16 %v100
    %v621 = vunpack.c.h.b16 %v100
    %v622 = vunpack.c.l.b16 %v101
    %v623 = vunpack.c.l.b16 %v102
    %v624 = vunpack.c.h.b16 %v102
    %v625 = vunpack.c.l.b16 %v103
    %v626 = vunpack.c.h.b16 %v103
    %v627 = vunpack.c.l.b16 %v104
    %v628 = vunpack.c.h.b16 %v104
    %v629 = vunpack.c.l.b16 %v105
    %v630 = vunpack.c.h.b16 %v105
    %v631 = vunpack.c.l.b16 %v106
    %v632 = vunpack.c.l.b16 %v107
    %v633 = vunpack.c.h.b16 %v107
    %v634 = vunpack.c.l.b16 %v108
    %v635 = vunpack.c.h.b16 %v108
    %v636 = vunpack.c.l.b16 %v109
    %v637 = vunpack.c.h.b16 %v109
    %v638 = vunpack.c.l.b16 %v110
    %v639 = vunpack.c.h.b16 %v110
    %v640 = vunpack.c.l.b16 %v111
    %v641 = vunpack.c.l.b16 %v112
    %v642 = vunpack.c.h.b16 %v112
    %v643 = vunpack.c.l.b16 %v113
    %v644 = vunpack.c.h.b16 %v113
    %v645 = vunpack.c.l.b16 %v114
    %v646 = vunpack.c.h.b16 %v114
    %v647 = vunpack.c.l.b16 %v115
    %v648 = vunpack.c.h.b16 %v115
    %v649 = vunpack.c.l.b16 %v116
    %v650 = vunpack.c.l.b16 %v117
    %v651 = vunpack.c.h.b16 %v117
    %v652 = vunpack.c.l.b16 %v118
    %v653 = vunpack.c.h.b16 %v118
    %v654 = vunpack.c.l.b16 %v119
    %v655 = vunpack.c.h.b16 %v119
    %v656 = vunpack.c.l.b16 %v120
    %v657 = vunpack.c.h.b16 %v120
    %v658 = vunpack.c.l.b16 %v121
    %v659 = vunpack.c.l.b16 %v122
    %v660 = vunpack.c.h.b16 %v122
    %v661 = vunpack.c.l.b16 %v123
    %v662 = vunpack.c.h.b16 %v123
    %v663 = vunpack.c.l.b16 %v124
    %v664 = vunpack.c.h.b16 %v124
    %v665 = vunpack.c.l.b16 %v125
    %v666 = vunpack.c.h.b16 %v125
    %v667 = vunpack.c.l.b16 %v126
    %v668 = vunpack.c.l.b16 %v127
    %v669 = vunpack.c.h.b16 %v127
    %v670 = vunpack.c.l.b16 %v128
    %v671 = vunpack.c.h.b16 %v128
    %v672 = vunpack.c.l.b16 %v129
    %v673 = vunpack.c.h.b16 %v129
    %v674 = vunpack.c.l.b16 %v130
    %v675 = vunpack.c.h.b16 %v130
    %v676 = vunpack.c.l.b16 %v131
    %v677 = vunpack.c.l.b16 %v132
    %v678 = vunpack.c.h.b16 %v132
    %v679 = vunpack.c.l.b16 %v133
    %v680 = vunpack.c.h.b16 %v133
    %v681 = vunpack.c.l.b16 %v134
    %v682 = vunpack.c.h.b16 %v134
    %v683 = vunpack.c.l.b16 %v135
    %v684 = vunpack.c.h.b16 %v135
    %v685 = vunpack.c.l.b16 %v136
    %v686 = vunpack.c.l.b16 %v137
    %v687 = vunpack.c.h.b16 %v137
    %v688 = vunpack.c.l.b16 %v138
    %v689 = vunpack.c.h.b16 %v138
    %v690 = vunpack.c.l.b16 %v139
    %v691 = vunpack.c.h.b16 %v139
    %v692 = vunpack.c.l.b16 %v140
    %v693 = vunpack.c.h.b16 %v140
    %v694 = vunpack.c.l.b16 %v141
    %v695 = vunpack.c.l.b16 %v142
    %v696 = vunpack.c.h.b16 %v142
    %v697 = vunpack.c.l.b16 %v143
    %v698 = vunpack.c.h.b16 %v143
    %v699 = vunpack.c.l.b16 %v144
    %v700 = vunpack.c.h.b16 %v144
    %v701 = vunpack.c.l.b16 %v145
    %v702 = vunpack.c.h.b16 %v145
    %v703 = vunpack.c.l.b16 %v146
    %v704 = vunpack.c.l.b16 %v147
    %v705 = vunpack.c.h.b16 %v147
    %v706 = vunpack.c.l.b16 %v148
    %v707 = vunpack.c.h.b16 %v148
    %v708 = vunpack.c.l.b16 %v149
    %v709 = vunpack.c.h.b16 %v149
    %v710 = vunpack.c.l.b16 %v150
    %v711 = vunpack.c.h.b16 %v150
    %v712 = vunpack.c.l.b16 %v151
    %v713 = vunpack.c.l.b16 %v152
    %v714 = vunpack.c.h.b16 %v152
    %v715 = vunpack.c.l.b16 %v153
    %v716 = vunpack.c.h.b16 %v153
    %v717 = vunpack.c.l.b16 %v154
    %v718 = vunpack.c.h.b16 %v154
    %v719 = vunpack.c.l.b16 %v155
    %v720 = vunpack.c.h.b16 %v155
    %v721 = vunpack.c.l.b16 %v156
    %v722 = vunpack.c.l.b16 %v157
    %v723 = vunpack.c.h.b16 %v157
    %v724 = vunpack.c.l.b16 %v158
    %v725 = vunpack.c.h.b16 %v158
    %v726 = vunpack.c.l.b16 %v159
    %v727 = vunpack.c.h.b16 %v159
    %v728 = vunpack.c.l.b16 %v160
    %v729 = vunpack.c.h.b16 %v160
    %v730 = vunpack.c.l.b16 %v161
    %v731 = vunpack.c.l.b16 %v162
    %v732 = vunpack.c.h.b16 %v162
    %v733 = vunpack.c.l.b16 %v163
    %v734 = vunpack.c.h.b16 %v163
    %v735 = vunpack.c.l.b16 %v164
    %v736 = vunpack.c.h.b16 %v164
    %v737 = vunpack.c.l.b16 %v165
    %v738 = vunpack.c.h.b16 %v165
    %v739 = vunpack.c.l.b16 %v166
    %v740 = vunpack.c.l.b16 %v167
    %v741 = vunpack.c.h.b16 %v167
    %v742 = vunpack.c.l.b16 %v168
    %v743 = vunpack.c.h.b16 %v168
    %v744 = vunpack.c.l.b16 %v169
    %v745 = vunpack.c.h.b16 %v169
    %v746 = vunpack.c.l.b16 %v170
    %v747 = vunpack.c.h.b16 %v170
    %v748 = vunpack.c.l.b16 %v171
    %v749 = vunpack.c.l.b16 %v172
    %v750 = vunpack.c.h.b16 %v172
    %v751 = vunpack.c.l.b16 %v173
    %v752 = vunpack.c.h.b16 %v173
    %v753 = vunpack.c.l.b16 %v174
    %v754 = vunpack.c.h.b16 %v174
    %v755 = vunpack.c.l.b16 %v175
    %v756 = vunpack.c.h.b16 %v175
    %v757 = vunpack.c.l.b16 %v176
    %v758 = vunpack.c.l.b16 %v177
    %v759 = vunpack.c.h.b16 %v177
    %v760 = vunpack.c.l.b16 %v178
    %v761 = vunpack.c.h.b16 %v178
    %v762 = vunpack.c.l.b16 %v179
    %v763 = vunpack.c.h.b16 %v179
    %v764 = vunpack.c.l.b16 %v180
    %v765 = vunpack.c.h.b16 %v180
    %v766 = vunpack.c.l.b16 %v181
    %v767 = vunpack.c.l.b16 %v182
    %v768 = vunpack.c.h.b16 %v182
    %v769 = vunpack.c.l.b16 %v183
    %v770 = vunpack.c.h.b16 %v183
    %v771 = vunpack.c.l.b16 %v184
    %v772 = vunpack.c.h.b16 %v184
    %v773 = vunpack.c.l.b16 %v185
    %v774 = vunpack.c.h.b16 %v185
    %v775 = vunpack.c.l.b16 %v186
    %v776 = vunpack.c.l.b16 %v187
    %v777 = vunpack.c.h.b16 %v187
    %v778 = vunpack.c.l.b16 %v188
    %v779 = vunpack.c.h.b16 %v188
    %v780 = vunpack.c.l.b16 %v189
    %v781 = vunpack.c.h.b16 %v189
    %v782 = vunpack.c.l.b16 %v190
    %v783 = vunpack.c.h.b16 %v190
    %v784 = vunpack.c.l.b16 %v191
    %v785 = vunpack.c.l.b16 %v192
    %v786 = vunpack.c.h.b16 %v192
    %v787 = vunpack.c.l.b16 %v193
    %v788 = vunpack.c.h.b16 %v193
    %v789 = vunpack.c.l.b16 %v194
    %v790 = vunpack.c.h.b16 %v194
    %v791 = vunpack.c.l.b16 %v195
    %v792 = vunpack.c.h.b16 %v195
    %v793 = vunpack.c.l.b16 %v196
    %v794 = vunpack.c.l.b16 %v197
    %v795 = vunpack.c.h.b16 %v197
    %v796 = vunpack.c.l.b16 %v198
    %v797 = vunpack.c.h.b16 %v198
    %v798 = vunpack.c.l.b16 %v199
    %v799 = vunpack.c.h.b16 %v199
    %v800 = vunpack.c.l.b16 %v200
    %v801 = vunpack.c.h.b16 %v200
    %v802 = vunpack.c.l.b16 %v201
    %v803 = vunpack.c.l.b16 %v202
    %v804 = vunpack.c.h.b16 %v202
    %v805 = vunpack.c.l.b16 %v203
    %v806 = vunpack.c.h.b16 %v203
    %v807 = vunpack.c.l.b16 %v204
    %v808 = vunpack.c.h.b16 %v204
    %v809 = vunpack.c.l.b16 %v205
    %v810 = vunpack.c.h.b16 %v205
    %v811 = vunpack.c.l.b16 %v206
    %v812 = vunpack.c.l.b16 %v207
    %v813 = vunpack.c.h.b16 %v207
    %v814 = vunpack.c.l.b16 %v208
    %v815 = vunpack.c.h.b16 %v208
    %v816 = vunpack.c.l.b16 %v209
    %v817 = vunpack.c.h.b16 %v209
    %v818 = vunpack.c.l.b16 %v210
    %v819 = vunpack.c.h.b16 %v210
    %v820 = vunpack.c.l.b16 %v211
    %v821 = vunpack.c.l.b16 %v212
    %v822 = vunpack.c.h.b16 %v212
    %v823 = vunpack.c.l.b16 %v213
    %v824 = vunpack.c.h.b16 %v213
    %v825 = vunpack.c.l.b16 %v214
    %v826 = vunpack.c.h.b16 %v214
    %v827 = vunpack.c.l.b16 %v215
    %v828 = vunpack.c.h.b16 %v215
    %v829 = vunpack.c.l.b16 %v216
    %v830 = vunpack.c.l.b16 %v217
    %v831 = vunpack.c.h.b16 %v217
    %v832 = vunpack.c.l.b16 %v218
    %v833 = vunpack.c.h.b16 %v218
    %v834 = vunpack.c.l.b16 %v219
    %v835 = vunpack.c.h.b16 %v219
    %v836 = vunpack.c.l.b16 %v220
    %v837 = vunpack.c.h.b16 %v220
    %v838 = vunpack.c.l.b16 %v221
    %v839 = vunpack.c.l.b16 %v222
    %v840 = vunpack.c.h.b16 %v222
    %v841 = vunpack.c.l.b16 %v223
    %v842 = vunpack.c.h.b16 %v223
    %v843 = vunpack.c.l.b16 %v224
    %v844 = vunpack.c.h.b16 %v224
    %v845 = vunpack.c.l.b16 %v225
    %v846 = vunpack.c.h.b16 %v225
    %v847 = vunpack.c.l.b16 %v226
    %v848 = vunpack.c.l.b16 %v227
    %v849 = vunpack.c.h.b16 %v227
    %v850 = vunpack.c.l.b16 %v228
    %v851 = vunpack.c.h.b16 %v228
    %v852 = vunpack.c.l.b16 %v229
    %v853 = vunpack.c.h.b16 %v229
    %v854 = vunpack.c.l.b16 %v230
    %v855 = vunpack.c.h.b16 %v230
    %v856 = vunpack.c.l.b16 %v231
    %v857 = vunpack.c.l.b16 %v232
    %v858 = vunpack.c.h.b16 %v232
    %v859 = vunpack.c.l.b16 %v233
    %v860 = vunpack.c.h.b16 %v233
    %v861 = vunpack.c.l.b16 %v234
    %v862 = vunpack.c.h.b16 %v234
    %v863 = vunpack.c.l.b16 %v235
    %v864 = vunpack.c.h.b16 %v235
    %v865 = vunpack.c.l.b16 %v236
    %v866 = vunpack.c.l.b16 %v237
    %v867 = vunpack.c.h.b16 %v237
    %v868 = vunpack.c.l.b16 %v238
    %v869 = vunpack.c.h.b16 %v238
    %v870 = vunpack.c.l.b16 %v239
    %v871 = vunpack.c.h.b16 %v239
    %v872 = vunpack.c.l.b16 %v240
    %v873 = vunpack.c.h.b16 %v240
    %v874 = vunpack.c.l.b16 %v241
    %v875 = vpack.c.b16 %v515, %v506
    %v876 = vpack.c.b16 %v516, %v507
    %v877 = vpack.c.b16 %v517, %v508
    %v878 = vpack.c.b16 %v518, %v509
    %v879 = vpack.c.b16 %v519, %v510
    %v880 = vpack.c.b16 %v520, %v511
    %v881 = vpack.c.b16 %v521, %v512
    %v882 = vpack.c.b16 %v522, %v513
    %v883 = vpack.c.b16 %v523, %v514
    %v884 = vpack.c.b16 %v533, %v524
    %v885 = vpack.c.b16 %v534, %v525
    %v886 = vpack.c.b16 %v535, %v526
    %v887 = vpack.c.b16 %v536, %v527
    %v888 = vpack.c.b16 %v537, %v528
    %v889 = vpack.c.b16 %v538, %v529
    %v890 = vpack.c.b16 %v539, %v530
    %v891 = vpack.c.b16 %v540, %v531
    %v892 = vpack.c.b16 %v541, %v532
    %v893 = vpack.c.b16 %v551, %v542
    %v894 = vpack.c.b16 %v552, %v543
    %v895 = vpack.c.b16 %v553, %v544
    %v896 = vpack.c.b16 %v554, %v545
    %v897 = vpack.c.b16 %v555, %v546
    %v898 = vpack.c.b16 %v556, %v547
    %v899 = vpack.c.b16 %v557, %v548
    %v900 = vpack.c.b16 %v558, %v549
    %v901 = vpack.c.b16 %v559, %v550
    %v902 = vpack.c.b16 %v569, %v560
    %v903 = vpack.c.b16 %v570, %v561
    %v904 = vpack.c.b16 %v571, %v562
    %v905 = vpack.c.b16 %v572, %v563
    %v906 = vpack.c.b16 %v573, %v564
    %v907 = vpack.c.b16 %v574, %v565
    %v908 = vpack.c.b16 %v575, %v566
    %v909 = vpack.c.b16 %v576, %v567
    %v910 = vpack.c.b16 %v577, %v568
    %v911 = vpack.c.b16 %v587, %v578
    %v912 = vpack.c.b16 %v588, %v579
    %v913 = vpack.c.b16 %v589, %v580
    %v914 = vpack.c.b16 %v590, %v581
    %v915 = vpack.c.b16 %v591, %v582
    %v916 = vpack.c.b16 %v592, %v583
    %v917 = vpack.c.b16 %v593, %v584
    %v918 = vpack.c.b16 %v594, %v585
    %v919 = vpack.c.b16 %v595, %v586
    %v920 = vpack.c.b16 %v605, %v596
    %v921 = vpack.c.b16 %v606, %v597
    %v922 = vpack.c.b16 %v607, %v598
    %v923 = vpack.c.b16 %v608, %v599
    %v924 = vpack.c.b16 %v609, %v600
    %v925 = vpack.c.b16 %v610, %v601
    %v926 = vpack.c.b16 %v611, %v602
    %v927 = vpack.c.b16 %v612, %v603
    %v928 = vpack.c.b16 %v613, %v604
    %v929 = vpack.c.b16 %v623, %v614
    %v930 = vpack.c.b16 %v624, %v615
    %v931 = vpack.c.b16 %v625, %v616
    %v932 = vpack.c.b16 %v626, %v617
    %v933 = vpack.c.b16 %v627, %v618
    %v934 = vpack.c.b16 %v628, %v619
    %v935 = vpack.c.b16 %v629, %v620
    %v936 = vpack.c.b16 %v630, %v621
    %v937 = vpack.c.b16 %v631, %v622
    %v938 = vpack.c.b16 %v641, %v632
    %v939 = vpack.c.b16 %v642, %v633
    %v940 = vpack.c.b16 %v643, %v634
    %v941 = vpack.c.b16 %v644, %v635
    %v942 = vpack.c.b16 %v645, %v636
    %v943 = vpack.c.b16 %v646, %v637
    %v944 = vpack.c.b16 %v647, %v638
    %v945 = vpack.c.b16 %v648, %v639
    %v946 = vpack.c.b16 %v649, %v640
    %v947 = vpack.c.b16 %v659, %v650
    %v948 = vpack.c.b16 %v660, %v651
    %v949 = vpack.c.b16 %v661, %v652
    %v950 = vpack.c.b16 %v662, %v653
    %v951 = vpack.c.b16 %v663, %v654
    %v952 = vpack.c.b16 %v664, %v655
    %v953 = vpack.c.b16 %v665, %v656
    %v954 = vpack.c.b16 %v666, %v657
    %v955 = vpack.c.b16 %v667, %v658
    %v956 = vpack.c.b16 %v677, %v668
    %v957 = vpack.c.b16 %v678, %v669
    %v958 = vpack.c.b16 %v679, %v670
    %v959 = vpack.c.b16 %v680, %v671
    %v960 = vpack.c.b16 %v681, %v672
    %v961 = vpack.c.b16 %v682, %v673
    %v962 = vpack.c.b16 %v683, %v674
    %v963 = vpack.c.b16 %v684, %v675
    %v964 = vpack.c.b16 %v685, %v676
    %v965 = vpack.c.b16 %v695, %v686
    %v966 = vpack.c.b16 %v696, %v687
    %v967 = vpack.c.b16 %v697, %v688
    %v968 = vpack.c.b16 %v698, %v689
    %v969 = vpack.c.b16 %v699, %v690
    %v970 = vpack.c.b16 %v700, %v691
    %v971 = vpack.c.b16 %v701, %v692
    %v972 = vpack.c.b16 %v702, %v693
    %v973 = vpack.c.b16 %v703, %v694
    %v974 = vpack.c.b16 %v713, %v704
    %v975 = vpack.c.b16 %v714, %v705
    %v976 = vpack.c.b16 %v715, %v706
    %v977 = vpack.c.b16 %v716, %v707
    %v978 = vpack.c.b16 %v717, %v708
    %v979 = vpack.c.b16 %v718, %v709
    %v980 = vpack.c.b16 %v719, %v710
    %v981 = vpack.c.b16 %v720, %v711
    %v982 = vpack.c.b16 %v721, %v712
    %v983 = vpack.c.b16 %v731, %v722
    %v984 = vpack.c.b16 %v732, %v723
    %v985 = vpack.c.b16 %v733, %v724
    %v986 = vpack.c.b16 %v734, %v725
    %v987 = vpack.c.b16 %v735, %v726
    %v988 = vpack.c.b16 %v736, %v727
    %v989 = vpack.c.b16 %v737, %v728
    %v990 = vpack.c.b16 %v738, %v729
    %v991 = vpack.c.b16 %v739, %v730
    %v992 = vpack.c.b16 %v749, %v740
    %v993 = vpack.c.b16 %v750, %v741
    %v994 = vpack.c.b16 %v751, %v742
    %v995 = vpack.c.b16 %v752, %v743
    %v996 = vpack.c.b16 %v753, %v744
    %v997 = vpack.c.b16 %v754, %v745
    %v998 = vpack.c.b16 %v755, %v746
    %v999 = vpack.c.b16 %v756, %v747
    %v1000 = vpack.c.b16 %v757, %v748
    %v1001 = vpack.c.b16 %v767, %v758
    %v1002 = vpack.c.b16 %v768, %v759
    %v1003 = vpack.c.b16 %v769, %v760
    %v1004 = vpack.c.b16 %v770, %v761
    %v1005 = vpack.c.b16 %v771, %v762
    %v1006 = vpack.c.b16 %v772, %v763
    %v1007 = vpack.c.b16 %v773, %v764
    %v1008 = vpack.c.b16 %v774, %v765
    %v1009 = vpack.c.b16 %v775, %v766
    %v1010 = vpack.c.b16 %v785, %v776
    %v1011 = vpack.c.b16 %v786, %v777
    %v1012 = vpack.c.b16 %v787, %v778
    %v1013 = vpack.c.b16 %v788, %v779
    %v1014 = vpack.c.b16 %v789, %v780
    %v1015 = vpack.c.b16 %v790, %v781
    %v1016 = vpack.c.b16 %v791, %v782
    %v1017 = vpack.c.b16 %v792, %v783
    %v1018 = vpack.c.b16 %v793, %v784
    %v1019 = vpack.c.b16 %v803, %v794
    %v1020 = vpack.c.b16 %v804, %v795
    %v1021 = vpack.c.b16 %v805, %v796
    %v1022 = vpack.c.b16 %v806, %v797
    %v1023 = vpack.c.b16 %v807, %v798
    %v1024 = vpack.c.b16 %v808, %v799
    %v1025 = vpack.c.b16 %v809, %v800
    %v1026 = vpack.c.b16 %v810, %v801
    %v1027 = vpack.c.b16 %v811, %v802
    %v1028 = vpack.c.b16 %v821, %v812
    %v1029 = vpack.c.b16 %v822, %v813
    %v1030 = vpack.c.b16 %v823, %v814
    %v1031 = vpack.c.b16 %v824, %v815
    %v1032 = vpack.c.b16 %v825, %v816
    %v1033 = vpack.c.b16 %v826, %v817
    %v1034 = vpack.c.b16 %v827, %v818
    %v1035 = vpack.c.b16 %v828, %v819
    %v1036 = vpack.c.b16 %v829, %v820
    %v1037 = vpack.c.b16 %v839, %v830
    %v1038 = vpack.c.b16 %v840, %v831
    %v1039 = vpack.c.b16 %v841, %v832
    %v1040 = vpack.c.b16 %v842, %v833
    %v1041 = vpack.c.b16 %v843, %v834
    %v1042 = vpack.c.b16 %v844, %v835
    %v1043 = vpack.c.b16 %v845, %v836
    %v1044 = vpack.c.b16 %v846, %v837
    %v1045 = vpack.c.b16 %v847, %v838
    %v1046 = vpack.c.b16 %v857, %v848
    %v1047 = vpack.c.b16 %v858, %v849
    %v1048 = vpack.c.b16 %v859, %v850
    %v1049 = vpack.c.b16 %v860, %v851
    %v1050 = vpack.c.b16 %v861, %v852
    %v1051 = vpack.c.b16 %v862, %v853
    %v1052 = vpack.c.b16 %v863, %v854
    %v1053 = vpack.c.b16 %v864, %v855
    %v1054 = vpack.c.b16 %v865, %v856
    %v1055 = vpack.c.b16 %v866, %v866
    %v1056 = vpack.c.b16 %v867, %v867
    %v1057 = vpack.c.b16 %v868, %v868
    %v1058 = vpack.c.b16 %v869, %v869
    %v1059 = vpack.c.b16 %v870, %v870
    %v1060 = vpack.c.b16 %v871, %v871
    %v1061 = vpack.c.b16 %v872, %v872
    %v1062 = vpack.c.b16 %v873, %v873
    %v1063 = vpack.c.b16 %v874, %v874
    %vm1244 = vcmask 556032
    %v1246 = vsel %vm1244, %v298, 0
    %vm1248 = vcmask 1041408
    %v1250 = vsel %vm1248, %v1055, 0
    %v1253 = vsel %vm1248, %v1056, 0
    %v1256 = vsel %vm1248, %v1057, 0
    %v1259 = vsel %vm1248, %v1058, 0
    %v1262 = vsel %vm1248, %v1059, 0
    %v1265 = vsel %vm1248, %v1060, 0
    %v1268 = vsel %vm1248, %v1061, 0
    %v1271 = vsel %vm1248, %v1062, 0
    %v1274 = vsel %vm1248, %v1063, 0
    %1276 = vmatprep.subr.bf16.mxu0 %v876
    %1277 = vmatpush1.bf16.msra.mxu0 %v875
    %1278 = vmatprep.subr.bf16.mxu0 %v885
    %1279 = vmatpush1.bf16.msra.mxu0 %v884
    %1280 = vmatprep.subr.bf16.mxu0 %v894
    %1281 = vmatpush1.bf16.msra.mxu0 %v893
    %1282 = vmatprep.subr.bf16.mxu0 %v903
    %1283 = vmatpush1.bf16.msra.mxu0 %v902
    %1284 = vmatprep.subr.bf16.mxu0 %v912
    %1285 = vmatpush1.bf16.msra.mxu0 %v911
    %1286 = vmatprep.subr.bf16.mxu0 %v921
    %1287 = vmatpush1.bf16.msra.mxu0 %v920
    %1288 = vmatprep.subr.bf16.mxu0 %v930
    %1289 = vmatpush1.bf16.msra.mxu0 %v929
    %1290 = vmatprep.subr.bf16.mxu0 %v939
    %1291 = vmatpush1.bf16.msra.mxu0 %v938
    %1292 = vmatprep.subr.bf16.mxu0 %v948
    %1293 = vmatpush1.bf16.msra.mxu0 %v947
    %1294 = vmatprep.subr.bf16.mxu0 %v957
    %1295 = vmatpush1.bf16.msra.mxu0 %v956
    %1296 = vmatprep.subr.bf16.mxu0 %v966
    %1297 = vmatpush1.bf16.msra.mxu0 %v965
    %1298 = vmatprep.subr.bf16.mxu0 %v975
    %1299 = vmatpush1.bf16.msra.mxu0 %v974
    %1300 = vmatprep.subr.bf16.mxu0 %v984
    %1301 = vmatpush1.bf16.msra.mxu0 %v983
    %1302 = vmatprep.subr.bf16.mxu0 %v993
    %1303 = vmatpush1.bf16.msra.mxu0 %v992
    %1304 = vmatprep.subr.bf16.mxu0 %v1002
    %1305 = vmatpush1.bf16.msra.mxu0 %v1001
    %1306 = vmatprep.subr.bf16.mxu0 %v1011
    %1307 = vmatpush1.bf16.msra.mxu0 %v1010
    %1308 = vmatprep.mubr.bf16.mxu0 %v297
    %1309 = vmatmul.mubr.bf16.gmra.mrb[0].mxu0 %v296
    %v1310 = vpop.f32.mrb[0].mxu0
    %v1311 = vadd.f32 %v249, %v1310
    %v1312 = vpop.f32.mrb[0].mxu0
    %v1313 = vadd.f32 %v253, %v1312
    %v1314 = vpop.f32.mrb[0].mxu0
    %v1315 = vpop.f32.mrb[0].mxu0
    %1316 = vdwg.mxu0
    %1317 = vmatprep.subr.bf16.mxu0 %v1020
    %1318 = vmatpush1.bf16.msra.mxu0 %v1019
    %1319 = vmatprep.subr.bf16.mxu0 %v1029
    %1320 = vmatpush1.bf16.msra.mxu0 %v1028
    %1321 = vmatprep.subr.bf16.mxu0 %v1038
    %1322 = vmatpush1.bf16.msra.mxu0 %v1037
    %1323 = vmatprep.subr.bf16.mxu0 %v1047
    %1324 = vmatpush1.bf16.msra.mxu0 %v1046
    %1325 = vmatprep.subr.bf16.mxu0 %v1253
    %1326 = vmatpush1.bf16.msra.mxu0 %v1250
    %1327 = vmatprep.subr.bf16.mxu0 0
    %1328 = vmatpush1.bf16.msra.mxu0 0
    %1329 = vmatprep.subr.bf16.mxu0 0
    %1330 = vmatpush1.bf16.msra.mxu0 0
    %1331 = vmatprep.subr.bf16.mxu0 0
    %1332 = vmatpush1.bf16.msra.mxu0 0
    %1333 = vmatprep.subr.bf16.mxu0 0
    %1334 = vmatpush1.bf16.msra.mxu0 0
    %1335 = vmatprep.subr.bf16.mxu0 0
    %1336 = vmatpush1.bf16.msra.mxu0 0
    %1337 = vmatprep.subr.bf16.mxu0 0
    %1338 = vmatpush1.bf16.msra.mxu0 0
    %1339 = vmatprep.subr.bf16.mxu0 0
    %1340 = vmatpush1.bf16.msra.mxu0 0
    %1341 = vmatprep.subr.bf16.mxu0 0
    %1342 = vmatpush1.bf16.msra.mxu0 0
    %1343 = vmatprep.subr.bf16.mxu0 0
    %1344 = vmatpush1.bf16.msra.mxu0 0
    %1345 = vmatprep.subr.bf16.mxu0 0
    %1346 = vmatpush1.bf16.msra.mxu0 0
    %1347 = vmatprep.subr.bf16.mxu0 0
    %1348 = vmatpush1.bf16.msra.mxu0 0
    %1349 = vmatprep.mubr.bf16.mxu0 0
    %1350 = vmatmul.mubr.bf16.gmra.mrb[0].mxu0 %v1246
    %v1351 = vpop.f32.mrb[0].mxu0
    %v1352 = vadd.f32 %v1311, %v1351
    %v1353 = vpop.f32.mrb[0].mxu0
    %v1354 = vadd.f32 %v1313, %v1353
    %v1355 = vpop.f32.mrb[0].mxu0
    %v1356 = vpop.f32.mrb[0].mxu0
    %1357 = vdwg.mxu0
    %1358 = vmatprep.subr.bf16.mxu0 %v878
    %1359 = vmatpush1.bf16.msra.mxu0 %v877
    %1360 = vmatprep.subr.bf16.mxu0 %v887
    %1361 = vmatpush1.bf16.msra.mxu0 %v886
    %1362 = vmatprep.subr.bf16.mxu0 %v896
    %1363 = vmatpush1.bf16.msra.mxu0 %v895
    %1364 = vmatprep.subr.bf16.mxu0 %v905
    %1365 = vmatpush1.bf16.msra.mxu0 %v904
    %1366 = vmatprep.subr.bf16.mxu0 %v914
    %1367 = vmatpush1.bf16.msra.mxu0 %v913
    %1368 = vmatprep.subr.bf16.mxu0 %v923
    %1369 = vmatpush1.bf16.msra.mxu0 %v922
    %1370 = vmatprep.subr.bf16.mxu0 %v932
    %1371 = vmatpush1.bf16.msra.mxu0 %v931
    %1372 = vmatprep.subr.bf16.mxu0 %v941
    %1373 = vmatpush1.bf16.msra.mxu0 %v940
    %1374 = vmatprep.subr.bf16.mxu0 %v950
    %1375 = vmatpush1.bf16.msra.mxu0 %v949
    %1376 = vmatprep.subr.bf16.mxu0 %v959
    %1377 = vmatpush1.bf16.msra.mxu0 %v958
    %1378 = vmatprep.subr.bf16.mxu0 %v968
    %1379 = vmatpush1.bf16.msra.mxu0 %v967
    %1380 = vmatprep.subr.bf16.mxu0 %v977
    %1381 = vmatpush1.bf16.msra.mxu0 %v976
    %1382 = vmatprep.subr.bf16.mxu0 %v986
    %1383 = vmatpush1.bf16.msra.mxu0 %v985
    %1384 = vmatprep.subr.bf16.mxu0 %v995
    %1385 = vmatpush1.bf16.msra.mxu0 %v994
    %1386 = vmatprep.subr.bf16.mxu0 %v1004
    %1387 = vmatpush1.bf16.msra.mxu0 %v1003
    %1388 = vmatprep.subr.bf16.mxu0 %v1013
    %1389 = vmatpush1.bf16.msra.mxu0 %v1012
    %1390 = vmatprep.mubr.bf16.mxu0 %v297
    %1391 = vmatmul.mubr.bf16.gmra.mrb[0].mxu0 %v296
    %v1392 = vpop.f32.mrb[0].mxu0
    %v1393 = vadd.f32 %v257, %v1392
    %v1394 = vpop.f32.mrb[0].mxu0
    %v1395 = vadd.f32 %v261, %v1394
    %v1396 = vpop.f32.mrb[0].mxu0
    %v1397 = vpop.f32.mrb[0].mxu0
    %1398 = vdwg.mxu0
    %1399 = vmatprep.subr.bf16.mxu0 %v1022
    %1400 = vmatpush1.bf16.msra.mxu0 %v1021
    %1401 = vmatprep.subr.bf16.mxu0 %v1031
    %1402 = vmatpush1.bf16.msra.mxu0 %v1030
    %1403 = vmatprep.subr.bf16.mxu0 %v1040
    %1404 = vmatpush1.bf16.msra.mxu0 %v1039
    %1405 = vmatprep.subr.bf16.mxu0 %v1049
    %1406 = vmatpush1.bf16.msra.mxu0 %v1048
    %1407 = vmatprep.subr.bf16.mxu0 %v1259
    %1408 = vmatpush1.bf16.msra.mxu0 %v1256
    %1409 = vmatprep.subr.bf16.mxu0 0
    %1410 = vmatpush1.bf16.msra.mxu0 0
    %1411 = vmatprep.subr.bf16.mxu0 0
    %1412 = vmatpush1.bf16.msra.mxu0 0
    %1413 = vmatprep.subr.bf16.mxu0 0
    %1414 = vmatpush1.bf16.msra.mxu0 0
    %1415 = vmatprep.subr.bf16.mxu0 0
    %1416 = vmatpush1.bf16.msra.mxu0 0
    %1417 = vmatprep.subr.bf16.mxu0 0
    %1418 = vmatpush1.bf16.msra.mxu0 0
    %1419 = vmatprep.subr.bf16.mxu0 0
    %1420 = vmatpush1.bf16.msra.mxu0 0
    %1421 = vmatprep.subr.bf16.mxu0 0
    %1422 = vmatpush1.bf16.msra.mxu0 0
    %1423 = vmatprep.subr.bf16.mxu0 0
    %1424 = vmatpush1.bf16.msra.mxu0 0
    %1425 = vmatprep.subr.bf16.mxu0 0
    %1426 = vmatpush1.bf16.msra.mxu0 0
    %1427 = vmatprep.subr.bf16.mxu0 0
    %1428 = vmatpush1.bf16.msra.mxu0 0
    %1429 = vmatprep.subr.bf16.mxu0 0
    %1430 = vmatpush1.bf16.msra.mxu0 0
    %1431 = vmatprep.mubr.bf16.mxu0 0
    %1432 = vmatmul.mubr.bf16.gmra.mrb[0].mxu0 %v1246
    %v1433 = vpop.f32.mrb[0].mxu0
    %v1434 = vadd.f32 %v1393, %v1433
    %v1435 = vpop.f32.mrb[0].mxu0
    %v1436 = vadd.f32 %v1395, %v1435
    %v1437 = vpop.f32.mrb[0].mxu0
    %v1438 = vpop.f32.mrb[0].mxu0
    %1439 = vdwg.mxu0
    %1440 = vmatprep.subr.bf16.mxu0 %v880
    %1441 = vmatpush1.bf16.msra.mxu0 %v879
    %1442 = vmatprep.subr.bf16.mxu0 %v889
    %1443 = vmatpush1.bf16.msra.mxu0 %v888
    %1444 = vmatprep.subr.bf16.mxu0 %v898
    %1445 = vmatpush1.bf16.msra.mxu0 %v897
    %1446 = vmatprep.subr.bf16.mxu0 %v907
    %1447 = vmatpush1.bf16.msra.mxu0 %v906
    %1448 = vmatprep.subr.bf16.mxu0 %v916
    %1449 = vmatpush1.bf16.msra.mxu0 %v915
    %1450 = vmatprep.subr.bf16.mxu0 %v925
    %1451 = vmatpush1.bf16.msra.mxu0 %v924
    %1452 = vmatprep.subr.bf16.mxu0 %v934
    %1453 = vmatpush1.bf16.msra.mxu0 %v933
    %1454 = vmatprep.subr.bf16.mxu0 %v943
    %1455 = vmatpush1.bf16.msra.mxu0 %v942
    %1456 = vmatprep.subr.bf16.mxu0 %v952
    %1457 = vmatpush1.bf16.msra.mxu0 %v951
    %1458 = vmatprep.subr.bf16.mxu0 %v961
    %1459 = vmatpush1.bf16.msra.mxu0 %v960
    %1460 = vmatprep.subr.bf16.mxu0 %v970
    %1461 = vmatpush1.bf16.msra.mxu0 %v969
    %1462 = vmatprep.subr.bf16.mxu0 %v979
    %1463 = vmatpush1.bf16.msra.mxu0 %v978
    %1464 = vmatprep.subr.bf16.mxu0 %v988
    %1465 = vmatpush1.bf16.msra.mxu0 %v987
    %1466 = vmatprep.subr.bf16.mxu0 %v997
    %1467 = vmatpush1.bf16.msra.mxu0 %v996
    %1468 = vmatprep.subr.bf16.mxu0 %v1006
    %1469 = vmatpush1.bf16.msra.mxu0 %v1005
    %1470 = vmatprep.subr.bf16.mxu0 %v1015
    %1471 = vmatpush1.bf16.msra.mxu0 %v1014
    %1472 = vmatprep.mubr.bf16.mxu0 %v297
    %1473 = vmatmul.mubr.bf16.gmra.mrb[0].mxu0 %v296
    %v1474 = vpop.f32.mrb[0].mxu0
    %v1475 = vadd.f32 %v265, %v1474
    %v1476 = vpop.f32.mrb[0].mxu0
    %v1477 = vadd.f32 %v269, %v1476
    %v1478 = vpop.f32.mrb[0].mxu0
    %v1479 = vpop.f32.mrb[0].mxu0
    %1480 = vdwg.mxu0
    %1481 = vmatprep.subr.bf16.mxu0 %v1024
    %1482 = vmatpush1.bf16.msra.mxu0 %v1023
    %1483 = vmatprep.subr.bf16.mxu0 %v1033
    %1484 = vmatpush1.bf16.msra.mxu0 %v1032
    %1485 = vmatprep.subr.bf16.mxu0 %v1042
    %1486 = vmatpush1.bf16.msra.mxu0 %v1041
    %1487 = vmatprep.subr.bf16.mxu0 %v1051
    %1488 = vmatpush1.bf16.msra.mxu0 %v1050
    %1489 = vmatprep.subr.bf16.mxu0 %v1265
    %1490 = vmatpush1.bf16.msra.mxu0 %v1262
    %1491 = vmatprep.subr.bf16.mxu0 0
    %1492 = vmatpush1.bf16.msra.mxu0 0
    %1493 = vmatprep.subr.bf16.mxu0 0
    %1494 = vmatpush1.bf16.msra.mxu0 0
    %1495 = vmatprep.subr.bf16.mxu0 0
    %1496 = vmatpush1.bf16.msra.mxu0 0
    %1497 = vmatprep.subr.bf16.mxu0 0
    %1498 = vmatpush1.bf16.msra.mxu0 0
    %1499 = vmatprep.subr.bf16.mxu0 0
    %1500 = vmatpush1.bf16.msra.mxu0 0
    %1501 = vmatprep.subr.bf16.mxu0 0
    %1502 = vmatpush1.bf16.msra.mxu0 0
    %1503 = vmatprep.subr.bf16.mxu0 0
    %1504 = vmatpush1.bf16.msra.mxu0 0
    %1505 = vmatprep.subr.bf16.mxu0 0
    %1506 = vmatpush1.bf16.msra.mxu0 0
    %1507 = vmatprep.subr.bf16.mxu0 0
    %1508 = vmatpush1.bf16.msra.mxu0 0
    %1509 = vmatprep.subr.bf16.mxu0 0
    %1510 = vmatpush1.bf16.msra.mxu0 0
    %1511 = vmatprep.subr.bf16.mxu0 0
    %1512 = vmatpush1.bf16.msra.mxu0 0
    %1513 = vmatprep.mubr.bf16.mxu0 0
    %1514 = vmatmul.mubr.bf16.gmra.mrb[0].mxu0 %v1246
    %v1515 = vpop.f32.mrb[0].mxu0
    %v1516 = vadd.f32 %v1475, %v1515
    %v1517 = vpop.f32.mrb[0].mxu0
    %v1518 = vadd.f32 %v1477, %v1517
    %v1519 = vpop.f32.mrb[0].mxu0
    %v1520 = vpop.f32.mrb[0].mxu0
    %1521 = vdwg.mxu0
    %1522 = vmatprep.subr.bf16.mxu0 %v882
    %1523 = vmatpush1.bf16.msra.mxu0 %v881
    %1524 = vmatprep.subr.bf16.mxu0 %v891
    %1525 = vmatpush1.bf16.msra.mxu0 %v890
    %1526 = vmatprep.subr.bf16.mxu0 %v900
    %1527 = vmatpush1.bf16.msra.mxu0 %v899
    %1528 = vmatprep.subr.bf16.mxu0 %v909
    %1529 = vmatpush1.bf16.msra.mxu0 %v908
    %1530 = vmatprep.subr.bf16.mxu0 %v918
    %1531 = vmatpush1.bf16.msra.mxu0 %v917
    %1532 = vmatprep.subr.bf16.mxu0 %v927
    %1533 = vmatpush1.bf16.msra.mxu0 %v926
    %1534 = vmatprep.subr.bf16.mxu0 %v936
    %1535 = vmatpush1.bf16.msra.mxu0 %v935
    %1536 = vmatprep.subr.bf16.mxu0 %v945
    %1537 = vmatpush1.bf16.msra.mxu0 %v944
    %1538 = vmatprep.subr.bf16.mxu0 %v954
    %1539 = vmatpush1.bf16.msra.mxu0 %v953
    %1540 = vmatprep.subr.bf16.mxu0 %v963
    %1541 = vmatpush1.bf16.msra.mxu0 %v962
    %1542 = vmatprep.subr.bf16.mxu0 %v972
    %1543 = vmatpush1.bf16.msra.mxu0 %v971
    %1544 = vmatprep.subr.bf16.mxu0 %v981
    %1545 = vmatpush1.bf16.msra.mxu0 %v980
    %1546 = vmatprep.subr.bf16.mxu0 %v990
    %1547 = vmatpush1.bf16.msra.mxu0 %v989
    %1548 = vmatprep.subr.bf16.mxu0 %v999
    %1549 = vmatpush1.bf16.msra.mxu0 %v998
    %1550 = vmatprep.subr.bf16.mxu0 %v1008
    %1551 = vmatpush1.bf16.msra.mxu0 %v1007
    %1552 = vmatprep.subr.bf16.mxu0 %v1017
    %1553 = vmatpush1.bf16.msra.mxu0 %v1016
    %1554 = vmatprep.mubr.bf16.mxu0 %v297
    %1555 = vmatmul.mubr.bf16.gmra.mrb[0].mxu0 %v296
    %v1556 = vpop.f32.mrb[0].mxu0
    %v1557 = vadd.f32 %v273, %v1556
    %v1558 = vpop.f32.mrb[0].mxu0
    %v1559 = vadd.f32 %v277, %v1558
    %v1560 = vpop.f32.mrb[0].mxu0
    %v1561 = vpop.f32.mrb[0].mxu0
    %1562 = vdwg.mxu0
    %1563 = vmatprep.subr.bf16.mxu0 %v1026
    %1564 = vmatpush1.bf16.msra.mxu0 %v1025
    %1565 = vmatprep.subr.bf16.mxu0 %v1035
    %1566 = vmatpush1.bf16.msra.mxu0 %v1034
    %1567 = vmatprep.subr.bf16.mxu0 %v1044
    %1568 = vmatpush1.bf16.msra.mxu0 %v1043
    %1569 = vmatprep.subr.bf16.mxu0 %v1053
    %1570 = vmatpush1.bf16.msra.mxu0 %v1052
    %1571 = vmatprep.subr.bf16.mxu0 %v1271
    %1572 = vmatpush1.bf16.msra.mxu0 %v1268
    %1573 = vmatprep.subr.bf16.mxu0 0
    %1574 = vmatpush1.bf16.msra.mxu0 0
    %1575 = vmatprep.subr.bf16.mxu0 0
    %1576 = vmatpush1.bf16.msra.mxu0 0
    %1577 = vmatprep.subr.bf16.mxu0 0
    %1578 = vmatpush1.bf16.msra.mxu0 0
    %1579 = vmatprep.subr.bf16.mxu0 0
    %1580 = vmatpush1.bf16.msra.mxu0 0
    %1581 = vmatprep.subr.bf16.mxu0 0
    %1582 = vmatpush1.bf16.msra.mxu0 0
    %1583 = vmatprep.subr.bf16.mxu0 0
    %1584 = vmatpush1.bf16.msra.mxu0 0
    %1585 = vmatprep.subr.bf16.mxu0 0
    %1586 = vmatpush1.bf16.msra.mxu0 0
    %1587 = vmatprep.subr.bf16.mxu0 0
    %1588 = vmatpush1.bf16.msra.mxu0 0
    %1589 = vmatprep.subr.bf16.mxu0 0
    %1590 = vmatpush1.bf16.msra.mxu0 0
    %1591 = vmatprep.subr.bf16.mxu0 0
    %1592 = vmatpush1.bf16.msra.mxu0 0
    %1593 = vmatprep.subr.bf16.mxu0 0
    %1594 = vmatpush1.bf16.msra.mxu0 0
    %1595 = vmatprep.mubr.bf16.mxu0 0
    %1596 = vmatmul.mubr.bf16.gmra.mrb[0].mxu0 %v1246
    %v1597 = vpop.f32.mrb[0].mxu0
    %v1598 = vadd.f32 %v1557, %v1597
    %v1599 = vpop.f32.mrb[0].mxu0
    %v1600 = vadd.f32 %v1559, %v1599
    %v1601 = vpop.f32.mrb[0].mxu0
    %v1602 = vpop.f32.mrb[0].mxu0
    %1603 = vdwg.mxu0
    %1604 = vmatprep.subr.bf16.mxu0 0
    %1605 = vmatpush1.bf16.msra.mxu0 %v883
    %1606 = vmatprep.subr.bf16.mxu0 0
    %1607 = vmatpush1.bf16.msra.mxu0 %v892
    %1608 = vmatprep.subr.bf16.mxu0 0
    %1609 = vmatpush1.bf16.msra.mxu0 %v901
    %1610 = vmatprep.subr.bf16.mxu0 0
    %1611 = vmatpush1.bf16.msra.mxu0 %v910
    %1612 = vmatprep.subr.bf16.mxu0 0
    %1613 = vmatpush1.bf16.msra.mxu0 %v919
    %1614 = vmatprep.subr.bf16.mxu0 0
    %1615 = vmatpush1.bf16.msra.mxu0 %v928
    %1616 = vmatprep.subr.bf16.mxu0 0
    %1617 = vmatpush1.bf16.msra.mxu0 %v937
    %1618 = vmatprep.subr.bf16.mxu0 0
    %1619 = vmatpush1.bf16.msra.mxu0 %v946
    %1620 = vmatprep.subr.bf16.mxu0 0
    %1621 = vmatpush1.bf16.msra.mxu0 %v955
    %1622 = vmatprep.subr.bf16.mxu0 0
    %1623 = vmatpush1.bf16.msra.mxu0 %v964
    %1624 = vmatprep.subr.bf16.mxu0 0
    %1625 = vmatpush1.bf16.msra.mxu0 %v973
    %1626 = vmatprep.subr.bf16.mxu0 0
    %1627 = vmatpush1.bf16.msra.mxu0 %v982
    %1628 = vmatprep.subr.bf16.mxu0 0
    %1629 = vmatpush1.bf16.msra.mxu0 %v991
    %1630 = vmatprep.subr.bf16.mxu0 0
    %1631 = vmatpush1.bf16.msra.mxu0 %v1000
    %1632 = vmatprep.subr.bf16.mxu0 0
    %1633 = vmatpush1.bf16.msra.mxu0 %v1009
    %1634 = vmatprep.subr.bf16.mxu0 0
    %1635 = vmatpush1.bf16.msra.mxu0 %v1018
    %1636 = vmatprep.mubr.bf16.mxu0 %v297
    %1637 = vmatmul.mubr.bf16.gmra.mrb[0].mxu0 %v296
    %v1638 = vpop.f32.mrb[0].mxu0
    %v1639 = vadd.f32 %v281, %v1638
    %v1640 = vpop.f32.mrb[0].mxu0
    %v1641 = vpop.f32.mrb[0].mxu0
    %v1642 = vpop.f32.mrb[0].mxu0
    %1643 = vdwg.mxu0
    %1644 = vmatprep.subr.bf16.mxu0 0
    %1645 = vmatpush1.bf16.msra.mxu0 %v1027
    %1646 = vmatprep.subr.bf16.mxu0 0
    %1647 = vmatpush1.bf16.msra.mxu0 %v1036
    %1648 = vmatprep.subr.bf16.mxu0 0
    %1649 = vmatpush1.bf16.msra.mxu0 %v1045
    %1650 = vmatprep.subr.bf16.mxu0 0
    %1651 = vmatpush1.bf16.msra.mxu0 %v1054
    %1652 = vmatprep.subr.bf16.mxu0 0
    %1653 = vmatpush1.bf16.msra.mxu0 %v1274
    %1654 = vmatprep.subr.bf16.mxu0 0
    %1655 = vmatpush1.bf16.msra.mxu0 0
    %1656 = vmatprep.subr.bf16.mxu0 0
    %1657 = vmatpush1.bf16.msra.mxu0 0
    %1658 = vmatprep.subr.bf16.mxu0 0
    %1659 = vmatpush1.bf16.msra.mxu0 0
    %1660 = vmatprep.subr.bf16.mxu0 0
    %1661 = vmatpush1.bf16.msra.mxu0 0
    %1662 = vmatprep.subr.bf16.mxu0 0
    %1663 = vmatpush1.bf16.msra.mxu0 0
    %1664 = vmatprep.subr.bf16.mxu0 0
    %1665 = vmatpush1.bf16.msra.mxu0 0
    %1666 = vmatprep.subr.bf16.mxu0 0
    %1667 = vmatpush1.bf16.msra.mxu0 0
    %1668 = vmatprep.subr.bf16.mxu0 0
    %1669 = vmatpush1.bf16.msra.mxu0 0
    %1670 = vmatprep.subr.bf16.mxu0 0
    %1671 = vmatpush1.bf16.msra.mxu0 0
    %1672 = vmatprep.subr.bf16.mxu0 0
    %1673 = vmatpush1.bf16.msra.mxu0 0
    %1674 = vmatprep.subr.bf16.mxu0 0
    %1675 = vmatpush1.bf16.msra.mxu0 0
    %1676 = vmatprep.mubr.bf16.mxu0 0
    %1677 = vmatmul.mubr.bf16.gmra.mrb[0].mxu0 %v1246
    %v1678 = vpop.f32.mrb[0].mxu0
    %v1679 = vadd.f32 %v1639, %v1678
    %v1680 = vpop.f32.mrb[0].mxu0
    %v1681 = vpop.f32.mrb[0].mxu0
    %v1682 = vpop.f32.mrb[0].mxu0
    %1683 = vdwg.mxu0
    %v1684 = vmax.f32 %v1352, 0.0
    %v1685 = vmax.f32 %v1354, 0.0
    %v1686 = vmax.f32 %v1434, 0.0
    %v1687 = vmax.f32 %v1436, 0.0
    %v1688 = vmax.f32 %v1516, 0.0
    %v1689 = vmax.f32 %v1518, 0.0
    %v1690 = vmax.f32 %v1598, 0.0
    %v1691 = vmax.f32 %v1600, 0.0
    %v1692 = vmax.f32 %v1679, 0.0
    %v1693 = vpack.c.bf16 %v1684, %v1684
    %v1694 = vpack.c.bf16 %v1685, %v1685
    %v1695 = vpack.c.bf16 %v1686, %v1686
    %v1696 = vpack.c.bf16 %v1687, %v1687
    %v1697 = vpack.c.bf16 %v1688, %v1688
    %v1698 = vpack.c.bf16 %v1689, %v1689
    %v1699 = vpack.c.bf16 %v1690, %v1690
    %v1700 = vpack.c.bf16 %v1691, %v1691
    %v1701 = vpack.c.bf16 %v1692, %v1692
    %v1702 = vld [vmem:[%s3] sm:$0xf]
    %v1703 = vld [vmem:[%s3 + $0x4] sm:$0xf]
    %v1704 = vld [vmem:[%s3 + $0x8] sm:$0xf]
    %v1705 = vld [vmem:[%s3 + $0xc] sm:$0xf]
    %v1706 = vld [vmem:[%s3 + $0x10] sm:$0xf]
    %v1707 = vld [vmem:[%s3 + $0x14] sm:$0xf]
    %v1708 = vld [vmem:[%s3 + $0x18] sm:$0xf]
    %v1709 = vld [vmem:[%s3 + $0x1c] sm:$0xf]
    %v1710 = vld [vmem:[%s3 + $0x20] sm:$0xf]
    %v1711 = vld [vmem:[%s3 + $0x24] sm:$0xf]
    %v1712 = vld [vmem:[%s3 + $0x28] sm:$0xf]
    %v1713 = vld [vmem:[%s3 + $0x2c] sm:$0xf]
    %v1714 = vld [vmem:[%s3 + $0x30] sm:$0xf]
    %v1715 = vld [vmem:[%s3 + $0x34] sm:$0xf]
    %v1716 = vld [vmem:[%s3 + $0x38] sm:$0xf]
    %v1717 = vld [vmem:[%s3 + $0x3c] sm:$0xf]
    %v1718 = vld [vmem:[%s3 + $0x40] sm:$0xf]
    %v1719 = vld [vmem:[%s3 + $0x44] sm:$0xf]
    %v1720 = vld [vmem:[%s3 + $0x48] sm:$0xf]
    %v1721 = vld [vmem:[%s3 + $0x4c] sm:$0xf]
    %v1722 = vld [vmem:[%s3 + $0x50] sm:$0xf]
    %v1723 = vld [vmem:[%s3 + $0x54] sm:$0xf]
    %v1724 = vld [vmem:[%s3 + $0x58] sm:$0xf]
    %v1725 = vld [vmem:[%s3 + $0x5c] sm:$0xf]
    %v1726 = vld [vmem:[%s3 + $0x60] sm:$0xf]
    %v1727 = vld [vmem:[%s3 + $0x64] sm:$0xf]
    %v1728 = vld [vmem:[%s3 + $0x68] sm:$0xf]
    %v1729 = vld [vmem:[%s3 + $0x6c] sm:$0xf]
    %v1730 = vld [vmem:[%s3 + $0x70] sm:$0xf]
    %v1731 = vld [vmem:[%s3 + $0x74] sm:$0xf]
    %v1732 = vld [vmem:[%s3 + $0x78] sm:$0xf]
    %v1733 = vld [vmem:[%s3 + $0x7c] sm:$0xf]
    %v1734 = vld [vmem:[%s3 + $0x80] sm:$0xf]
    %v1735 = vld [vmem:[%s3 + $0x84] sm:$0xf]
    %v1736 = vld [vmem:[%s3 + $0x88] sm:$0xf]
    %v1737 = vld [vmem:[%s3 + $0x8c] sm:$0xf]
    %v1738 = vld [vmem:[%s3 + $0x90] sm:$0xf]
    %v1739 = vld [vmem:[%s3 + $0x94] sm:$0xf]
    %v1740 = vld [vmem:[%s3 + $0x98] sm:$0xf]
    %v1741 = vld [vmem:[%s3 + $0x9c] sm:$0xf]
    %v1742 = vld [vmem:[%s3 + $0xa0] sm:$0xf]
    %v1743 = vld [vmem:[%s3 + $0xa4] sm:$0xf]
    %v1744 = vld [vmem:[%s3 + $0xa8] sm:$0xf]
    %v1745 = vld [vmem:[%s3 + $0xac] sm:$0xf]
    %v1746 = vld [vmem:[%s3 + $0xb0] sm:$0xf]
    %v1747 = vld [vmem:[%s3 + $0xb4] sm:$0xf]
    %v1748 = vld [vmem:[%s3 + $0xb8] sm:$0xf]
    %v1749 = vld [vmem:[%s3 + $0xbc] sm:$0xf]
    %v1750 = vld [vmem:[%s3 + $0xc0] sm:$0xf]
    %v1751 = vld [vmem:[%s3 + $0xc4] sm:$0xf]
    %v1752 = vld [vmem:[%s3 + $0xc8] sm:$0xf]
    %v1753 = vld [vmem:[%s3 + $0xcc] sm:$0xf]
    %v1754 = vld [vmem:[%s3 + $0xd0] sm:$0xf]
    %v1755 = vld [vmem:[%s3 + $0xd4] sm:$0xf]
    %v1756 = vld [vmem:[%s3 + $0xd8] sm:$0xf]
    %v1757 = vld [vmem:[%s3 + $0xdc] sm:$0xf]
    %v1758 = vld [vmem:[%s3 + $0xe0] sm:$0xf]
    %v1759 = vld [vmem:[%s3 + $0xe4] sm:$0xf]
    %v1760 = vld [vmem:[%s3 + $0xe8] sm:$0xf]
    %v1761 = vld [vmem:[%s3 + $0xec] sm:$0xf]
    %v1762 = vld [vmem:[%s3 + $0xf0] sm:$0xf]
    %v1763 = vld [vmem:[%s3 + $0xf4] sm:$0xf]
    %v1764 = vld [vmem:[%s3 + $0xf8] sm:$0xf]
    %v1765 = vld [vmem:[%s3 + $0xfc] sm:$0xf]
    %v1766 = vld [vmem:[%s3 + $0x100] sm:$0xf]
    %v1767 = vld [vmem:[%s3 + $0x104] sm:$0xf]
    %v1768 = vld [vmem:[%s3 + $0x108] sm:$0xf]
    %v1769 = vld [vmem:[%s3 + $0x10c] sm:$0xf]
    %v1770 = vld [vmem:[%s3 + $0x110] sm:$0xf]
    %v1771 = vld [vmem:[%s3 + $0x114] sm:$0xf]
    %v1772 = vld [vmem:[%s3 + $0x118] sm:$0xf]
    %v1773 = vld [vmem:[%s3 + $0x11c] sm:$0xf]
    %v1774 = vld [vmem:[%s3 + $0x120] sm:$0xf]
    %v1775 = vld [vmem:[%s3 + $0x124] sm:$0xf]
    %v1776 = vld [vmem:[%s3 + $0x128] sm:$0xf]
    %v1777 = vld [vmem:[%s3 + $0x12c] sm:$0xf]
    %v1778 = vld [vmem:[%s3 + $0x130] sm:$0xf]
    %v1779 = vld [vmem:[%s3 + $0x134] sm:$0xf]
    %v1780 = vld [vmem:[%s3 + $0x138] sm:$0xf]
    %v1781 = vld [vmem:[%s3 + $0x13c] sm:$0xf]
    %v1782 = vld [vmem:[%s3 + $0x140] sm:$0xf]
    %v1783 = vld [vmem:[%s3 + $0x144] sm:$0xf]
    %v1784 = vld [vmem:[%s3 + $0x148] sm:$0xf]
    %v1785 = vld [vmem:[%s3 + $0x14c] sm:$0xf]
    %v1786 = vld [vmem:[%s3 + $0x150] sm:$0xf]
    %v1787 = vld [vmem:[%s3 + $0x154] sm:$0xf]
    %v1788 = vld [vmem:[%s3 + $0x158] sm:$0xf]
    %v1789 = vld [vmem:[%s3 + $0x15c] sm:$0xf]
    %v1790 = vld [vmem:[%s3 + $0x160] sm:$0xf]
    %v1791 = vld [vmem:[%s3 + $0x164] sm:$0xf]
    %v1792 = vld [vmem:[%s3 + $0x168] sm:$0xf]
    %v1793 = vld [vmem:[%s3 + $0x16c] sm:$0xf]
    %v1794 = vld [vmem:[%s3 + $0x170] sm:$0xf]
    %v1795 = vld [vmem:[%s3 + $0x174] sm:$0xf]
    %v1796 = vld [vmem:[%s3 + $0x178] sm:$0xf]
    %v1797 = vld [vmem:[%s3 + $0x17c] sm:$0xf]
    %v1798 = vld [vmem:[%s3 + $0x180] sm:$0xf]
    %v1799 = vld [vmem:[%s3 + $0x184] sm:$0xf]
    %v1800 = vld [vmem:[%s3 + $0x188] sm:$0xf]
    %v1801 = vld [vmem:[%s3 + $0x18c] sm:$0xf]
    %v1802 = vld [vmem:[%s3 + $0x190] sm:$0xf]
    %v1803 = vld [vmem:[%s3 + $0x194] sm:$0xf]
    %v1804 = vld [vmem:[%s3 + $0x198] sm:$0xf]
    %v1805 = vld [vmem:[%s3 + $0x19c] sm:$0xf]
    %v1806 = vld [vmem:[%s3 + $0x1a0] sm:$0xf]
    %v1807 = vld [vmem:[%s3 + $0x1a4] sm:$0xf]
    %v1808 = vld [vmem:[%s3 + $0x1a8] sm:$0xf]
    %v1809 = vld [vmem:[%s3 + $0x1ac] sm:$0xf]
    %v1810 = vld [vmem:[%s3 + $0x1b0] sm:$0xf]
    %v1811 = vld [vmem:[%s3 + $0x1b4] sm:$0xf]
    %v1812 = vld [vmem:[%s3 + $0x1b8] sm:$0xf]
    %v1813 = vld [vmem:[%s3 + $0x1bc] sm:$0xf]
    %v1814 = vld [vmem:[%s3 + $0x1c0] sm:$0xf]
    %v1815 = vld [vmem:[%s3 + $0x1c4] sm:$0xf]
    %v1816 = vld [vmem:[%s3 + $0x1c8] sm:$0xf]
    %v1817 = vld [vmem:[%s3 + $0x1cc] sm:$0xf]
    %v1818 = vld [vmem:[%s3 + $0x1d0] sm:$0xf]
    %v1819 = vld [vmem:[%s3 + $0x1d4] sm:$0xf]
    %v1820 = vld [vmem:[%s3 + $0x1d8] sm:$0xf]
    %v1821 = vld [vmem:[%s3 + $0x1dc] sm:$0xf]
    %v1822 = vld [vmem:[%s3 + $0x1e0] sm:$0xf]
    %v1823 = vld [vmem:[%s3 + $0x1e4] sm:$0xf]
    %v1824 = vld [vmem:[%s3 + $0x1e8] sm:$0xf]
    %v1825 = vld [vmem:[%s3 + $0x1ec] sm:$0xf]
    %v1826 = vld [vmem:[%s3 + $0x1f0] sm:$0xf]
    %v1827 = vld [vmem:[%s3 + $0x1f4] sm:$0xf]
    %v1828 = vld [vmem:[%s3 + $0x1f8] sm:$0xf]
    %v1829 = vld [vmem:[%s3 + $0x1fc] sm:$0xf]
    %v1830 = vld [vmem:[%s3 + $0x200] sm:$0xf]
    %v1831 = vld [vmem:[%s3 + $0x204] sm:$0xf]
    %v1832 = vld [vmem:[%s3 + $0x208] sm:$0xf]
    %v1833 = vld [vmem:[%s3 + $0x20c] sm:$0xf]
    %v1834 = vld [vmem:[%s3 + $0x210] sm:$0xf]
    %v1835 = vld [vmem:[%s3 + $0x214] sm:$0xf]
    %v1836 = vld [vmem:[%s3 + $0x218] sm:$0xf]
    %v1837 = vld [vmem:[%s3 + $0x21c] sm:$0xf]
    %v1838 = vld [vmem:[%s3 + $0x220] sm:$0xf]
    %v1839 = vld [vmem:[%s3 + $0x224] sm:$0xf]
    %v1840 = vld [vmem:[%s3 + $0x228] sm:$0xf]
    %v1841 = vld [vmem:[%s3 + $0x22c] sm:$0xf]
    %v1842 = vld [vmem:[%s3 + $0x230] sm:$0xf]
    %v1843 = vld [vmem:[%s3 + $0x234] sm:$0xf]
    %v1844 = vld [vmem:[%s3 + $0x238] sm:$0xf]
    %v1845 = vld [vmem:[%s3 + $0x23c] sm:$0xf]
    %v1846 = vld [vmem:[%s4] sm:$0x1]
    %v1848 = vlaneseq
    %v1849 = vshrl.u32 %v1848, 7
    %v1850 = vsub.s32 0, %v1849
    %v1851 = vrot.slane %v1846, %v1850
    %v1997 = vunpack.c.l.b16 %v1702
    %v1998 = vunpack.c.l.b16 %v1703
    %v1999 = vunpack.c.l.b16 %v1704
    %v2000 = vunpack.c.l.b16 %v1705
    %v2001 = vunpack.c.l.b16 %v1706
    %v2002 = vunpack.c.l.b16 %v1707
    %v2003 = vunpack.c.l.b16 %v1708
    %v2004 = vunpack.c.l.b16 %v1709
    %v2005 = vunpack.c.l.b16 %v1710
    %v2006 = vunpack.c.l.b16 %v1711
    %v2007 = vunpack.c.l.b16 %v1712
    %v2008 = vunpack.c.l.b16 %v1713
    %v2009 = vunpack.c.l.b16 %v1714
    %v2010 = vunpack.c.l.b16 %v1715
    %v2011 = vunpack.c.l.b16 %v1716
    %v2012 = vunpack.c.l.b16 %v1717
    %v2013 = vunpack.c.l.b16 %v1718
    %v2014 = vunpack.c.l.b16 %v1719
    %v2015 = vunpack.c.l.b16 %v1720
    %v2016 = vunpack.c.l.b16 %v1721
    %v2017 = vunpack.c.l.b16 %v1722
    %v2018 = vunpack.c.l.b16 %v1723
    %v2019 = vunpack.c.l.b16 %v1724
    %v2020 = vunpack.c.l.b16 %v1725
    %v2021 = vunpack.c.l.b16 %v1726
    %v2022 = vunpack.c.l.b16 %v1727
    %v2023 = vunpack.c.l.b16 %v1728
    %v2024 = vunpack.c.l.b16 %v1729
    %v2025 = vunpack.c.l.b16 %v1730
    %v2026 = vunpack.c.l.b16 %v1731
    %v2027 = vunpack.c.l.b16 %v1732
    %v2028 = vunpack.c.l.b16 %v1733
    %v2029 = vunpack.c.l.b16 %v1734
    %v2030 = vunpack.c.l.b16 %v1735
    %v2031 = vunpack.c.l.b16 %v1736
    %v2032 = vunpack.c.l.b16 %v1737
    %v2033 = vunpack.c.l.b16 %v1738
    %v2034 = vunpack.c.l.b16 %v1739
    %v2035 = vunpack.c.l.b16 %v1740
    %v2036 = vunpack.c.l.b16 %v1741
    %v2037 = vunpack.c.l.b16 %v1742
    %v2038 = vunpack.c.l.b16 %v1743
    %v2039 = vunpack.c.l.b16 %v1744
    %v2040 = vunpack.c.l.b16 %v1745
    %v2041 = vunpack.c.l.b16 %v1746
    %v2042 = vunpack.c.l.b16 %v1747
    %v2043 = vunpack.c.l.b16 %v1748
    %v2044 = vunpack.c.l.b16 %v1749
    %v2045 = vunpack.c.l.b16 %v1750
    %v2046 = vunpack.c.l.b16 %v1751
    %v2047 = vunpack.c.l.b16 %v1752
    %v2048 = vunpack.c.l.b16 %v1753
    %v2049 = vunpack.c.l.b16 %v1754
    %v2050 = vunpack.c.l.b16 %v1755
    %v2051 = vunpack.c.l.b16 %v1756
    %v2052 = vunpack.c.l.b16 %v1757
    %v2053 = vunpack.c.l.b16 %v1758
    %v2054 = vunpack.c.l.b16 %v1759
    %v2055 = vunpack.c.l.b16 %v1760
    %v2056 = vunpack.c.l.b16 %v1761
    %v2057 = vunpack.c.l.b16 %v1762
    %v2058 = vunpack.c.l.b16 %v1763
    %v2059 = vunpack.c.l.b16 %v1764
    %v2060 = vunpack.c.l.b16 %v1765
    %v2061 = vunpack.c.l.b16 %v1766
    %v2062 = vunpack.c.l.b16 %v1767
    %v2063 = vunpack.c.l.b16 %v1768
    %v2064 = vunpack.c.l.b16 %v1769
    %v2065 = vunpack.c.l.b16 %v1770
    %v2066 = vunpack.c.l.b16 %v1771
    %v2067 = vunpack.c.l.b16 %v1772
    %v2068 = vunpack.c.l.b16 %v1773
    %v2069 = vunpack.c.l.b16 %v1774
    %v2070 = vunpack.c.l.b16 %v1775
    %v2071 = vunpack.c.l.b16 %v1776
    %v2072 = vunpack.c.l.b16 %v1777
    %v2073 = vunpack.c.l.b16 %v1778
    %v2074 = vunpack.c.l.b16 %v1779
    %v2075 = vunpack.c.l.b16 %v1780
    %v2076 = vunpack.c.l.b16 %v1781
    %v2077 = vunpack.c.l.b16 %v1782
    %v2078 = vunpack.c.l.b16 %v1783
    %v2079 = vunpack.c.l.b16 %v1784
    %v2080 = vunpack.c.l.b16 %v1785
    %v2081 = vunpack.c.l.b16 %v1786
    %v2082 = vunpack.c.l.b16 %v1787
    %v2083 = vunpack.c.l.b16 %v1788
    %v2084 = vunpack.c.l.b16 %v1789
    %v2085 = vunpack.c.l.b16 %v1790
    %v2086 = vunpack.c.l.b16 %v1791
    %v2087 = vunpack.c.l.b16 %v1792
    %v2088 = vunpack.c.l.b16 %v1793
    %v2089 = vunpack.c.l.b16 %v1794
    %v2090 = vunpack.c.l.b16 %v1795
    %v2091 = vunpack.c.l.b16 %v1796
    %v2092 = vunpack.c.l.b16 %v1797
    %v2093 = vunpack.c.l.b16 %v1798
    %v2094 = vunpack.c.l.b16 %v1799
    %v2095 = vunpack.c.l.b16 %v1800
    %v2096 = vunpack.c.l.b16 %v1801
    %v2097 = vunpack.c.l.b16 %v1802
    %v2098 = vunpack.c.l.b16 %v1803
    %v2099 = vunpack.c.l.b16 %v1804
    %v2100 = vunpack.c.l.b16 %v1805
    %v2101 = vunpack.c.l.b16 %v1806
    %v2102 = vunpack.c.l.b16 %v1807
    %v2103 = vunpack.c.l.b16 %v1808
    %v2104 = vunpack.c.l.b16 %v1809
    %v2105 = vunpack.c.l.b16 %v1810
    %v2106 = vunpack.c.l.b16 %v1811
    %v2107 = vunpack.c.l.b16 %v1812
    %v2108 = vunpack.c.l.b16 %v1813
    %v2109 = vunpack.c.l.b16 %v1814
    %v2110 = vunpack.c.l.b16 %v1815
    %v2111 = vunpack.c.l.b16 %v1816
    %v2112 = vunpack.c.l.b16 %v1817
    %v2113 = vunpack.c.l.b16 %v1818
    %v2114 = vunpack.c.l.b16 %v1819
    %v2115 = vunpack.c.l.b16 %v1820
    %v2116 = vunpack.c.l.b16 %v1821
    %v2117 = vunpack.c.l.b16 %v1822
    %v2118 = vunpack.c.l.b16 %v1823
    %v2119 = vunpack.c.l.b16 %v1824
    %v2120 = vunpack.c.l.b16 %v1825
    %v2121 = vunpack.c.l.b16 %v1826
    %v2122 = vunpack.c.l.b16 %v1827
    %v2123 = vunpack.c.l.b16 %v1828
    %v2124 = vunpack.c.l.b16 %v1829
    %v2125 = vunpack.c.l.b16 %v1830
    %v2126 = vunpack.c.l.b16 %v1831
    %v2127 = vunpack.c.l.b16 %v1832
    %v2128 = vunpack.c.l.b16 %v1833
    %v2129 = vunpack.c.l.b16 %v1834
    %v2130 = vunpack.c.l.b16 %v1835
    %v2131 = vunpack.c.l.b16 %v1836
    %v2132 = vunpack.c.l.b16 %v1837
    %v2133 = vunpack.c.l.b16 %v1838
    %v2134 = vunpack.c.l.b16 %v1839
    %v2135 = vunpack.c.l.b16 %v1840
    %v2136 = vunpack.c.l.b16 %v1841
    %v2137 = vunpack.c.l.b16 %v1842
    %v2138 = vunpack.c.l.b16 %v1843
    %v2139 = vunpack.c.l.b16 %v1844
    %v2140 = vunpack.c.l.b16 %v1845
    %v2141 = vpack.c.b16 %v1998, %v1997
    %v2142 = vpack.c.b16 %v2000, %v1999
    %v2143 = vpack.c.b16 %v2002, %v2001
    %v2144 = vpack.c.b16 %v2004, %v2003
    %v2145 = vpack.c.b16 %v2006, %v2005
    %v2146 = vpack.c.b16 %v2008, %v2007
    %v2147 = vpack.c.b16 %v2010, %v2009
    %v2148 = vpack.c.b16 %v2012, %v2011
    %v2149 = vpack.c.b16 %v2014, %v2013
    %v2150 = vpack.c.b16 %v2016, %v2015
    %v2151 = vpack.c.b16 %v2018, %v2017
    %v2152 = vpack.c.b16 %v2020, %v2019
    %v2153 = vpack.c.b16 %v2022, %v2021
    %v2154 = vpack.c.b16 %v2024, %v2023
    %v2155 = vpack.c.b16 %v2026, %v2025
    %v2156 = vpack.c.b16 %v2028, %v2027
    %v2157 = vpack.c.b16 %v2030, %v2029
    %v2158 = vpack.c.b16 %v2032, %v2031
    %v2159 = vpack.c.b16 %v2034, %v2033
    %v2160 = vpack.c.b16 %v2036, %v2035
    %v2161 = vpack.c.b16 %v2038, %v2037
    %v2162 = vpack.c.b16 %v2040, %v2039
    %v2163 = vpack.c.b16 %v2042, %v2041
    %v2164 = vpack.c.b16 %v2044, %v2043
    %v2165 = vpack.c.b16 %v2046, %v2045
    %v2166 = vpack.c.b16 %v2048, %v2047
    %v2167 = vpack.c.b16 %v2050, %v2049
    %v2168 = vpack.c.b16 %v2052, %v2051
    %v2169 = vpack.c.b16 %v2054, %v2053
    %v2170 = vpack.c.b16 %v2056, %v2055
    %v2171 = vpack.c.b16 %v2058, %v2057
    %v2172 = vpack.c.b16 %v2060, %v2059
    %v2173 = vpack.c.b16 %v2062, %v2061
    %v2174 = vpack.c.b16 %v2064, %v2063
    %v2175 = vpack.c.b16 %v2066, %v2065
    %v2176 = vpack.c.b16 %v2068, %v2067
    %v2177 = vpack.c.b16 %v2070, %v2069
    %v2178 = vpack.c.b16 %v2072, %v2071
    %v2179 = vpack.c.b16 %v2074, %v2073
    %v2180 = vpack.c.b16 %v2076, %v2075
    %v2181 = vpack.c.b16 %v2078, %v2077
    %v2182 = vpack.c.b16 %v2080, %v2079
    %v2183 = vpack.c.b16 %v2082, %v2081
    %v2184 = vpack.c.b16 %v2084, %v2083
    %v2185 = vpack.c.b16 %v2086, %v2085
    %v2186 = vpack.c.b16 %v2088, %v2087
    %v2187 = vpack.c.b16 %v2090, %v2089
    %v2188 = vpack.c.b16 %v2092, %v2091
    %v2189 = vpack.c.b16 %v2094, %v2093
    %v2190 = vpack.c.b16 %v2096, %v2095
    %v2191 = vpack.c.b16 %v2098, %v2097
    %v2192 = vpack.c.b16 %v2100, %v2099
    %v2193 = vpack.c.b16 %v2102, %v2101
    %v2194 = vpack.c.b16 %v2104, %v2103
    %v2195 = vpack.c.b16 %v2106, %v2105
    %v2196 = vpack.c.b16 %v2108, %v2107
    %v2197 = vpack.c.b16 %v2110, %v2109
    %v2198 = vpack.c.b16 %v2112, %v2111
    %v2199 = vpack.c.b16 %v2114, %v2113
    %v2200 = vpack.c.b16 %v2116, %v2115
    %v2201 = vpack.c.b16 %v2118, %v2117
    %v2202 = vpack.c.b16 %v2120, %v2119
    %v2203 = vpack.c.b16 %v2122, %v2121
    %v2204 = vpack.c.b16 %v2124, %v2123
    %v2205 = vpack.c.b16 %v2126, %v2125
    %v2206 = vpack.c.b16 %v2128, %v2127
    %v2207 = vpack.c.b16 %v2130, %v2129
    %v2208 = vpack.c.b16 %v2132, %v2131
    %v2209 = vpack.c.b16 %v2134, %v2133
    %v2210 = vpack.c.b16 %v2136, %v2135
    %v2211 = vpack.c.b16 %v2138, %v2137
    %v2212 = vpack.c.b16 %v2140, %v2139
    %2285 = vmatprep.subr.bf16.mxu0 0
    %2286 = vmatpush1.bf16.msra.mxu0 %v2141
    %2287 = vmatprep.subr.bf16.mxu0 0
    %2288 = vmatpush1.bf16.msra.mxu0 %v2142
    %2289 = vmatprep.subr.bf16.mxu0 0
    %2290 = vmatpush1.bf16.msra.mxu0 %v2143
    %2291 = vmatprep.subr.bf16.mxu0 0
    %2292 = vmatpush1.bf16.msra.mxu0 %v2144
    %2293 = vmatprep.subr.bf16.mxu0 0
    %2294 = vmatpush1.bf16.msra.mxu0 %v2145
    %2295 = vmatprep.subr.bf16.mxu0 0
    %2296 = vmatpush1.bf16.msra.mxu0 %v2146
    %2297 = vmatprep.subr.bf16.mxu0 0
    %2298 = vmatpush1.bf16.msra.mxu0 %v2147
    %2299 = vmatprep.subr.bf16.mxu0 0
    %2300 = vmatpush1.bf16.msra.mxu0 %v2148
    %2301 = vmatprep.subr.bf16.mxu0 0
    %2302 = vmatpush1.bf16.msra.mxu0 %v2149
    %2303 = vmatprep.subr.bf16.mxu0 0
    %2304 = vmatpush1.bf16.msra.mxu0 %v2150
    %2305 = vmatprep.subr.bf16.mxu0 0
    %2306 = vmatpush1.bf16.msra.mxu0 %v2151
    %2307 = vmatprep.subr.bf16.mxu0 0
    %2308 = vmatpush1.bf16.msra.mxu0 %v2152
    %2309 = vmatprep.subr.bf16.mxu0 0
    %2310 = vmatpush1.bf16.msra.mxu0 %v2153
    %2311 = vmatprep.subr.bf16.mxu0 0
    %2312 = vmatpush1.bf16.msra.mxu0 %v2154
    %2313 = vmatprep.subr.bf16.mxu0 0
    %2314 = vmatpush1.bf16.msra.mxu0 %v2155
    %2315 = vmatprep.subr.bf16.mxu0 0
    %2316 = vmatpush1.bf16.msra.mxu0 %v2156
    %2317 = vmatprep.mubr.bf16.mxu0 %v1694
    %2318 = vmatmul.mubr.bf16.gmra.mrb[0].mxu0 %v1693
    %v2319 = vpop.f32.mrb[0].mxu0
    %v2320 = vadd.f32 %v1851, %v2319
    %v2321 = vpop.f32.mrb[0].mxu0
    %v2322 = vpop.f32.mrb[0].mxu0
    %v2323 = vpop.f32.mrb[0].mxu0
    %2324 = vdwg.mxu0
    %2325 = vmatprep.subr.bf16.mxu0 0
    %2326 = vmatpush1.bf16.msra.mxu0 %v2157
    %2327 = vmatprep.subr.bf16.mxu0 0
    %2328 = vmatpush1.bf16.msra.mxu0 %v2158
    %2329 = vmatprep.subr.bf16.mxu0 0
    %2330 = vmatpush1.bf16.msra.mxu0 %v2159
    %2331 = vmatprep.subr.bf16.mxu0 0
    %2332 = vmatpush1.bf16.msra.mxu0 %v2160
    %2333 = vmatprep.subr.bf16.mxu0 0
    %2334 = vmatpush1.bf16.msra.mxu0 %v2161
    %2335 = vmatprep.subr.bf16.mxu0 0
    %2336 = vmatpush1.bf16.msra.mxu0 %v2162
    %2337 = vmatprep.subr.bf16.mxu0 0
    %2338 = vmatpush1.bf16.msra.mxu0 %v2163
    %2339 = vmatprep.subr.bf16.mxu0 0
    %2340 = vmatpush1.bf16.msra.mxu0 %v2164
    %2341 = vmatprep.subr.bf16.mxu0 0
    %2342 = vmatpush1.bf16.msra.mxu0 %v2165
    %2343 = vmatprep.subr.bf16.mxu0 0
    %2344 = vmatpush1.bf16.msra.mxu0 %v2166
    %2345 = vmatprep.subr.bf16.mxu0 0
    %2346 = vmatpush1.bf16.msra.mxu0 %v2167
    %2347 = vmatprep.subr.bf16.mxu0 0
    %2348 = vmatpush1.bf16.msra.mxu0 %v2168
    %2349 = vmatprep.subr.bf16.mxu0 0
    %2350 = vmatpush1.bf16.msra.mxu0 %v2169
    %2351 = vmatprep.subr.bf16.mxu0 0
    %2352 = vmatpush1.bf16.msra.mxu0 %v2170
    %2353 = vmatprep.subr.bf16.mxu0 0
    %2354 = vmatpush1.bf16.msra.mxu0 %v2171
    %2355 = vmatprep.subr.bf16.mxu0 0
    %2356 = vmatpush1.bf16.msra.mxu0 %v2172
    %2357 = vmatprep.mubr.bf16.mxu0 %v1696
    %2358 = vmatmul.mubr.bf16.gmra.mrb[0].mxu0 %v1695
    %v2359 = vpop.f32.mrb[0].mxu0
    %v2360 = vadd.f32 %v2320, %v2359
    %v2361 = vpop.f32.mrb[0].mxu0
    %v2362 = vpop.f32.mrb[0].mxu0
    %v2363 = vpop.f32.mrb[0].mxu0
    %2364 = vdwg.mxu0
    %2365 = vmatprep.subr.bf16.mxu0 0
    %2366 = vmatpush1.bf16.msra.mxu0 %v2173
    %2367 = vmatprep.subr.bf16.mxu0 0
    %2368 = vmatpush1.bf16.msra.mxu0 %v2174
    %2369 = vmatprep.subr.bf16.mxu0 0
    %2370 = vmatpush1.bf16.msra.mxu0 %v2175
    %2371 = vmatprep.subr.bf16.mxu0 0
    %2372 = vmatpush1.bf16.msra.mxu0 %v2176
    %2373 = vmatprep.subr.bf16.mxu0 0
    %2374 = vmatpush1.bf16.msra.mxu0 %v2177
    %2375 = vmatprep.subr.bf16.mxu0 0
    %2376 = vmatpush1.bf16.msra.mxu0 %v2178
    %2377 = vmatprep.subr.bf16.mxu0 0
    %2378 = vmatpush1.bf16.msra.mxu0 %v2179
    %2379 = vmatprep.subr.bf16.mxu0 0
    %2380 = vmatpush1.bf16.msra.mxu0 %v2180
    %2381 = vmatprep.subr.bf16.mxu0 0
    %2382 = vmatpush1.bf16.msra.mxu0 %v2181
    %2383 = vmatprep.subr.bf16.mxu0 0
    %2384 = vmatpush1.bf16.msra.mxu0 %v2182
    %2385 = vmatprep.subr.bf16.mxu0 0
    %2386 = vmatpush1.bf16.msra.mxu0 %v2183
    %2387 = vmatprep.subr.bf16.mxu0 0
    %2388 = vmatpush1.bf16.msra.mxu0 %v2184
    %2389 = vmatprep.subr.bf16.mxu0 0
    %2390 = vmatpush1.bf16.msra.mxu0 %v2185
    %2391 = vmatprep.subr.bf16.mxu0 0
    %2392 = vmatpush1.bf16.msra.mxu0 %v2186
    %2393 = vmatprep.subr.bf16.mxu0 0
    %2394 = vmatpush1.bf16.msra.mxu0 %v2187
    %2395 = vmatprep.subr.bf16.mxu0 0
    %2396 = vmatpush1.bf16.msra.mxu0 %v2188
    %2397 = vmatprep.mubr.bf16.mxu0 %v1698
    %2398 = vmatmul.mubr.bf16.gmra.mrb[0].mxu0 %v1697
    %v2399 = vpop.f32.mrb[0].mxu0
    %v2400 = vadd.f32 %v2360, %v2399
    %v2401 = vpop.f32.mrb[0].mxu0
    %v2402 = vpop.f32.mrb[0].mxu0
    %v2403 = vpop.f32.mrb[0].mxu0
    %2404 = vdwg.mxu0
    %2405 = vmatprep.subr.bf16.mxu0 0
    %2406 = vmatpush1.bf16.msra.mxu0 %v2189
    %2407 = vmatprep.subr.bf16.mxu0 0
    %2408 = vmatpush1.bf16.msra.mxu0 %v2190
    %2409 = vmatprep.subr.bf16.mxu0 0
    %2410 = vmatpush1.bf16.msra.mxu0 %v2191
    %2411 = vmatprep.subr.bf16.mxu0 0
    %2412 = vmatpush1.bf16.msra.mxu0 %v2192
    %2413 = vmatprep.subr.bf16.mxu0 0
    %2414 = vmatpush1.bf16.msra.mxu0 %v2193
    %2415 = vmatprep.subr.bf16.mxu0 0
    %2416 = vmatpush1.bf16.msra.mxu0 %v2194
    %2417 = vmatprep.subr.bf16.mxu0 0
    %2418 = vmatpush1.bf16.msra.mxu0 %v2195
    %2419 = vmatprep.subr.bf16.mxu0 0
    %2420 = vmatpush1.bf16.msra.mxu0 %v2196
    %2421 = vmatprep.subr.bf16.mxu0 0
    %2422 = vmatpush1.bf16.msra.mxu0 %v2197
    %2423 = vmatprep.subr.bf16.mxu0 0
    %2424 = vmatpush1.bf16.msra.mxu0 %v2198
    %2425 = vmatprep.subr.bf16.mxu0 0
    %2426 = vmatpush1.bf16.msra.mxu0 %v2199
    %2427 = vmatprep.subr.bf16.mxu0 0
    %2428 = vmatpush1.bf16.msra.mxu0 %v2200
    %2429 = vmatprep.subr.bf16.mxu0 0
    %2430 = vmatpush1.bf16.msra.mxu0 %v2201
    %2431 = vmatprep.subr.bf16.mxu0 0
    %2432 = vmatpush1.bf16.msra.mxu0 %v2202
    %2433 = vmatprep.subr.bf16.mxu0 0
    %2434 = vmatpush1.bf16.msra.mxu0 %v2203
    %2435 = vmatprep.subr.bf16.mxu0 0
    %2436 = vmatpush1.bf16.msra.mxu0 %v2204
    %2437 = vmatprep.mubr.bf16.mxu0 %v1700
    %2438 = vmatmul.mubr.bf16.gmra.mrb[0].mxu0 %v1699
    %v2439 = vpop.f32.mrb[0].mxu0
    %v2440 = vadd.f32 %v2400, %v2439
    %v2441 = vpop.f32.mrb[0].mxu0
    %v2442 = vpop.f32.mrb[0].mxu0
    %v2443 = vpop.f32.mrb[0].mxu0
    %2444 = vdwg.mxu0
    %2445 = vmatprep.subr.bf16.mxu0 0
    %2446 = vmatpush1.bf16.msra.mxu0 %v2205
    %2447 = vmatprep.subr.bf16.mxu0 0
    %2448 = vmatpush1.bf16.msra.mxu0 %v2206
    %2449 = vmatprep.subr.bf16.mxu0 0
    %2450 = vmatpush1.bf16.msra.mxu0 %v2207
    %2451 = vmatprep.subr.bf16.mxu0 0
    %2452 = vmatpush1.bf16.msra.mxu0 %v2208
    %2453 = vmatprep.subr.bf16.mxu0 0
    %2454 = vmatpush1.bf16.msra.mxu0 %v2209
    %2455 = vmatprep.subr.bf16.mxu0 0
    %2456 = vmatpush1.bf16.msra.mxu0 %v2210
    %2457 = vmatprep.subr.bf16.mxu0 0
    %2458 = vmatpush1.bf16.msra.mxu0 %v2211
    %2459 = vmatprep.subr.bf16.mxu0 0
    %2460 = vmatpush1.bf16.msra.mxu0 %v2212
    %2461 = vmatprep.subr.bf16.mxu0 0
    %2462 = vmatpush1.bf16.msra.mxu0 0
    %2463 = vmatprep.subr.bf16.mxu0 0
    %2464 = vmatpush1.bf16.msra.mxu0 0
    %2465 = vmatprep.subr.bf16.mxu0 0
    %2466 = vmatpush1.bf16.msra.mxu0 0
    %2467 = vmatprep.subr.bf16.mxu0 0
    %2468 = vmatpush1.bf16.msra.mxu0 0
    %2469 = vmatprep.subr.bf16.mxu0 0
    %2470 = vmatpush1.bf16.msra.mxu0 0
    %2471 = vmatprep.subr.bf16.mxu0 0
    %2472 = vmatpush1.bf16.msra.mxu0 0
    %2473 = vmatprep.subr.bf16.mxu0 0
    %2474 = vmatpush1.bf16.msra.mxu0 0
    %2475 = vmatprep.subr.bf16.mxu0 0
    %2476 = vmatpush1.bf16.msra.mxu0 0
    %2477 = vmatprep.mubr.bf16.mxu0 0
    %2478 = vmatmul.mubr.bf16.gmra.mrb[0].mxu0 %v1701
    %v2479 = vpop.f32.mrb[0].mxu0
    %v2480 = vadd.f32 %v2440, %v2479
    %v2481 = vpop.f32.mrb[0].mxu0
    %v2482 = vpop.f32.mrb[0].mxu0
    %v2483 = vpop.f32.mrb[0].mxu0
    %2484 = vdwg.mxu0
    %v2485 = vmax.f32 %v2480, 0.0
    %2486 = vst [vmem:[%s5] sm:$0xff] %v2485
    // Predicated region
    $region26: #{core_conve_forward.1} parent=1 // pred_check
      _
    $region27: #{core_conve_forward.1} parent=1 // pred_check_branch
      %2488 = sbr.rel (0) target = $region29
    $region28: #{core_conve_forward.1} parent=1 // pred_region
      _
    $region29: #{core_conve_forward.1} parent=1 // pred_fallthru
      _
    // Predicated region
    $region30: #{core_conve_forward.1} parent=1 // pred_check
      _
    $region31: #{core_conve_forward.1} parent=1 // pred_check_branch
      %2490 = sbr.rel (0) target = $region33
    $region32: #{core_conve_forward.1} parent=1 // pred_region
      _
    $region33: #{core_conve_forward.1} parent=1 // pred_fallthru
      _
    %2491 = vsyncpa [#allocation3], 1

</llo_original>
